<compile_context>
chip_gen: v6e
topology: v6e:2x2x1
jax: 0.10.0
libtpu: 0.0.40
codegen_flags: <defaults>
</compile_context>

<pallas_src>
import functools

import jax
import jax.numpy as jnp
from jax.experimental import pallas as pl
from jax.experimental.pallas import tpu as pltpu


_NT_DIMS = (((1,), (1,)), ((), ()))   # contract last-with-last  (A @ B^T), no transpose op
_NN_DIMS = (((1,), (0,)), ((), ()))   # plain matmul

_SIGMA_TILE_BYTES = 4 * 1024 * 1024   # per-tile budget for pass A (double-buffered -> ~8 MiB)
_SCALE_TILE_BYTES = 2 * 1024 * 1024   # per-tile budget for pass B (in+out double-buffered -> ~8 MiB)


def _sigma_kernel(w_ref, u_ref, u_new_ref, sigma_ref, inv_sigma_ref, t_acc, s_acc):
    """Pass A: single sweep over C-tiles of W.

    w_ref         : (tc, D) weight tile (native dtype)
    u_ref         : (1, D)  f32  power-iteration vector (row layout)
    u_new_ref     : (1, D)  f32  updated u = normalize(W^T v)
    sigma_ref     : (1, 1)  f32  estimated largest singular value
    inv_sigma_ref : (1, 1)  f32  1 / sigma (consumed by the scaling pass)
    t_acc         : (1, D)  f32  VMEM accumulator for W^T (W u)
    s_acc         : (1, 1)  f32  VMEM accumulator for ||W u||^2
    """
    i = pl.program_id(0)

    @pl.when(i == 0)
    def _init():
        t_acc[...] = jnp.zeros_like(t_acc)
        s_acc[...] = jnp.zeros_like(s_acc)

    w = w_ref[...].astype(jnp.float32)   # (tc, D)
    u = u_ref[...]                       # (1, D)

    # r = (W_tile @ u) as a lane-dense row (1, tc): contract D with D, W in native layout.
    r = jax.lax.dot_general(u, w, _NT_DIMS, preferred_element_type=jnp.float32)
    # t += r @ W_tile : this tile's contribution to W^T (W u); lane-dense (1, D) row.
    t_acc[...] += jax.lax.dot_general(r, w, _NN_DIMS, preferred_element_type=jnp.float32)
    s_acc[...] += jnp.sum(r * r, keepdims=True)

    @pl.when(i == pl.num_programs(0) - 1)
    def _finalize():
        eps = jnp.float32(1e-12)                       # matches F.normalize default eps
        nv = jnp.maximum(jnp.sqrt(s_acc[...]), eps)    # (1,1)  ||W u||
        t = t_acc[...] / nv                            # (1,D)  == W^T v
        tsq = jnp.sum(t * t, keepdims=True)            # (1,1)
        nt = jnp.maximum(jnp.sqrt(tsq), eps)
        u_new_ref[...] = t / nt                        # normalize(W^T v)
        sigma = tsq / nt                               # == v^T W u_new == ||W^T v||
        sigma_ref[...] = sigma
        inv_sigma_ref[...] = 1.0 / sigma


def _scale_kernel(inv_sigma_ref, w_ref, o_ref):
    """Pass B: out tile = W tile * (1/sigma); 1/sigma is an SMEM scalar."""
    o_ref[...] = (w_ref[...] * inv_sigma_ref[0, 0]).astype(o_ref.dtype)


def _pick_tile(n, max_tile, align):
    """Largest multiple of `align` that divides n and is <= max_tile; else n (full dim)."""
    t = min(n, max_tile)
    t -= t % align
    while t >= align:
        if n % t == 0:
            return t
        t -= align
    return n


@functools.partial(jax.jit, static_argnames=("sigma_block_c",))
def spectral_normed_weight(w: jax.Array, u: jax.Array, *, sigma_block_c=None):
    """Returns (W / sigma, sigma, u_new).  w: (C, D), u: (D,)."""
    C, D = w.shape
    out_dtype = w.dtype
    u_row = u.astype(jnp.float32).reshape(1, D)

    # ---------- Pass A: sigma / 1/sigma / updated u (one HBM read of W) ----------
    # VMEM-budget-aware C tile: keep the double-buffered W tile under ~8 MiB.
    tca_cap = max(8, min(1024, (_SIGMA_TILE_BYTES // (D * 4)) // 8 * 8))
    if sigma_block_c is not None:
        tca_cap = min(tca_cap, int(sigma_block_c))
    tca = _pick_tile(C, tca_cap, 8)
    u_new, sigma, inv_sigma = pl.pallas_call(
        _sigma_kernel,
        out_shape=(
            jax.ShapeDtypeStruct((1, D), jnp.float32),
            jax.ShapeDtypeStruct((1, 1), jnp.float32),
            jax.ShapeDtypeStruct((1, 1), jnp.float32),
        ),
        grid=(C // tca,),
        in_specs=[
            pl.BlockSpec((tca, D), lambda i: (i, 0)),
            pl.BlockSpec((1, D), lambda i: (0, 0)),
        ],
        out_specs=(
            pl.BlockSpec((1, D), lambda i: (0, 0)),
            pl.BlockSpec((1, 1), lambda i: (0, 0)),
            pl.BlockSpec((1, 1), lambda i: (0, 0)),
        ),
        scratch_shapes=[
            pltpu.VMEM((1, D), jnp.float32),   # t accumulator (W^T W u)
            pltpu.VMEM((1, 1), jnp.float32),   # ||W u||^2 accumulator
        ],
        compiler_params=pltpu.CompilerParams(
            dimension_semantics=("arbitrary",),   # carried accumulators -> reduction axis
        ),
    )(w, u_row)

    # ---------- Pass B: memory-bound scaling pass, tiled & parallel ----------
    itemsize = jnp.dtype(out_dtype).itemsize
    tdb = _pick_tile(D, 2048, 128)   # lane-dense output slab -> unmasked stores
    tcb_cap = max(8, min(512, (_SCALE_TILE_BYTES // (tdb * itemsize)) // 8 * 8))
    tcb = _pick_tile(C, tcb_cap, 8)
    w_normed = pl.pallas_call(
        _scale_kernel,
        out_shape=jax.ShapeDtypeStruct((C, D), out_dtype),
        grid=(C // tcb, D // tdb),
        in_specs=[
            pl.BlockSpec(memory_space=pltpu.MemorySpace.SMEM),   # 1/sigma scalar
            pl.BlockSpec((tcb, tdb), lambda i, j: (i, j)),
        ],
        out_specs=pl.BlockSpec((tcb, tdb), lambda i, j: (i, j)),
        compiler_params=pltpu.CompilerParams(
            dimension_semantics=("parallel", "parallel"),
        ),
    )(inv_sigma, w)

    return w_normed, sigma[0, 0], u_new.reshape(D)


def _reference(w, u):
    """Pure-JAX reference mirroring the PyTorch module (high-precision matmuls)."""
    eps = 1e-12
    hp = jax.lax.Precision.HIGHEST
    v = jnp.dot(w, u, precision=hp)
    v = v / jnp.maximum(jnp.linalg.norm(v), eps)
    u_new = jnp.dot(w.T, v, precision=hp)
    u_new = u_new / jnp.maximum(jnp.linalg.norm(u_new), eps)
    sigma = jnp.einsum("c,cd,d->", v, w, u_new, precision=hp)
    return w / sigma, sigma, u_new


if __name__ == "__main__":
    key = jax.random.PRNGKey(0)
    C, D = 256, 512   # out_features, in_features of the wrapped linear weight
    weight = jax.random.normal(key, (C, D), dtype=jnp.float32)

    # Module __init__: u buffer = first right singular vector (vh[0]); the
    # spectral_norm buffer (s[0]) is not used in the eval-mode forward, kept for parity.
    _, s, vh = jnp.linalg.svd(weight, full_matrices=False)
    u0 = vh[0]                                              # (D,)
    spectral_norm_buf = s[0] * jnp.ones((1,), jnp.float32)  # noqa: F841

    # sigma_block_c=64 forces a 4-step reduction grid in pass A so the VMEM-accumulator
    # path is exercised even at this small shape.
    out, sigma, u_new = spectral_normed_weight(weight, u0, sigma_block_c=64)
    out = jax.block_until_ready(out)
    sigma = jax.block_until_ready(sigma)
    u_new = jax.block_until_ready(u_new)

    ref_out, ref_sigma, ref_u_new = _reference(weight, u0)
    assert jnp.allclose(out, ref_out, atol=1e-4, rtol=1e-4), "weight mismatch"
    assert jnp.allclose(sigma, ref_sigma, atol=1e-4, rtol=1e-4), "sigma mismatch"
    assert jnp.allclose(u_new, ref_u_new, atol=1e-4, rtol=1e-4), "u mismatch"

    print("KERNEL_OK")
</pallas_src>

<mosaic_0001>
module attributes {stable_mosaic.version = 11 : i64} {
  func.func @_scale_kernel(%arg0: i32, %arg1: i32, %arg2: memref<1x1xf32, #tpu.memory_space<smem>>, %arg3: memref<256x512xf32, #tpu.memory_space<vmem>>, %arg4: memref<256x512xf32, #tpu.memory_space<vmem>>) attributes {dimension_semantics = [#tpu.dimension_semantics<parallel>, #tpu.dimension_semantics<parallel>], iteration_bounds = array<i64: 1, 1>, scalar_prefetch = 0 : i64, scratch_operands = 0 : i64, tpu.core_type = #tpu.core_type<tc>, window_params = [{transform_indices = @transform_0, window_bounds = array<i64: 1, 1>}, {transform_indices = @transform_1, window_bounds = array<i64: 256, 512>}, {transform_indices = @transform_2, window_bounds = array<i64: 256, 512>}]} {
    %c0 = arith.constant 0 : index
    %c0_0 = arith.constant 0 : index
    %0 = vector.load %arg3[%c0, %c0_0] : memref<256x512xf32, #tpu.memory_space<vmem>>, vector<256x512xf32>
    %c0_1 = arith.constant 0 : index
    %c0_2 = arith.constant 0 : index
    %1 = memref.load %arg2[%c0_1, %c0_2] : memref<1x1xf32, #tpu.memory_space<smem>>
    %2 = vector.broadcast %1 : f32 to vector<256x512xf32>
    %3 = arith.mulf %0, %2 : vector<256x512xf32>
    %c0_3 = arith.constant 0 : index
    %c0_4 = arith.constant 0 : index
    %4 = vector.load %arg4[%c0_3, %c0_4] : memref<256x512xf32, #tpu.memory_space<vmem>>, vector<256x512xf32>
    tpu.vector_store %arg4[%c0_3, %c0_4], %3 {strides = array<i32>} : memref<256x512xf32, #tpu.memory_space<vmem>>, vector<256x512xf32>,
    return
  }
  func.func @transform_0(%arg0: i32, %arg1: i32) -> (i32, i32) {
    %c0_i32 = arith.constant 0 : i32
    %c0_i32_0 = arith.constant 0 : i32
    %c0_i32_1 = arith.constant 0 : i32
    return %c0_i32, %c0_i32_0 : i32, i32
  }
  func.func @transform_1(%arg0: i32, %arg1: i32) -> (i32, i32) {
    %c0_i32 = arith.constant 0 : i32
    return %arg0, %arg1 : i32, i32
  }
  func.func @transform_2(%arg0: i32, %arg1: i32) -> (i32, i32) {
    %c0_i32 = arith.constant 0 : i32
    return %arg0, %arg1 : i32, i32
  }
}

module attributes {stable_mosaic.version = 11 : i64} {
  func.func @_sigma_kernel(%arg0: i32, %arg1: memref<64x512xf32, #tpu.memory_space<vmem>>, %arg2: memref<1x512xf32, #tpu.memory_space<vmem>>, %arg3: memref<1x512xf32, #tpu.memory_space<vmem>>, %arg4: memref<1x1xf32, #tpu.memory_space<vmem>>, %arg5: memref<1x1xf32, #tpu.memory_space<vmem>>, %arg6: memref<1x512xf32, #tpu.memory_space<vmem>>, %arg7: memref<1x1xf32, #tpu.memory_space<vmem>>) attributes {dimension_semantics = [#tpu.dimension_semantics<arbitrary>], iteration_bounds = array<i64: 4>, scalar_prefetch = 0 : i64, scratch_operands = 2 : i64, tpu.core_type = #tpu.core_type<tc>, window_params = [{transform_indices = @transform_0, window_bounds = array<i64: 64, 512>}, {pipeline_mode = #tpu.pipeline_mode<synchronous>, transform_indices = @transform_1, window_bounds = array<i64: 1, 512>}, {pipeline_mode = #tpu.pipeline_mode<synchronous>, transform_indices = @transform_2, window_bounds = array<i64: 1, 512>}, {pipeline_mode = #tpu.pipeline_mode<synchronous>, transform_indices = @transform_3, window_bounds = array<i64: 1, 1>}, {pipeline_mode = #tpu.pipeline_mode<synchronous>, transform_indices = @transform_4, window_bounds = array<i64: 1, 1>}]} {
    %c0_i32 = arith.constant 0 : i32
    %0 = arith.cmpi eq, %arg0, %c0_i32 : i32
    %1 = arith.extui %0 : i1 to i32
    %c0_i32_0 = arith.constant 0 : i32
    %2 = arith.cmpi ne, %1, %c0_i32_0 : i32
    scf.if %2 {
      %cst_15 = arith.constant 0.000000e+00 : f32
      %22 = vector.broadcast %cst_15 : f32 to vector<1x512xf32>
      %c0_16 = arith.constant 0 : index
      %c0_17 = arith.constant 0 : index
      %23 = vector.load %arg6[%c0_16, %c0_17] : memref<1x512xf32, #tpu.memory_space<vmem>>, vector<1x512xf32>
      tpu.vector_store %arg6[%c0_16, %c0_17], %22 {strides = array<i32>} : memref<1x512xf32, #tpu.memory_space<vmem>>, vector<1x512xf32>,
      %cst_18 = arith.constant 0.000000e+00 : f32
      %24 = vector.broadcast %cst_18 : f32 to vector<1x1xf32>
      %c0_19 = arith.constant 0 : index
      %c0_20 = arith.constant 0 : index
      %25 = vector.load %arg7[%c0_19, %c0_20] : memref<1x1xf32, #tpu.memory_space<vmem>>, vector<1x1xf32>
      tpu.vector_store %arg7[%c0_19, %c0_20], %24 {strides = array<i32>} : memref<1x1xf32, #tpu.memory_space<vmem>>, vector<1x1xf32>,
    } else {
    }
    %c0 = arith.constant 0 : index
    %c0_1 = arith.constant 0 : index
    %3 = vector.load %arg1[%c0, %c0_1] : memref<64x512xf32, #tpu.memory_space<vmem>>, vector<64x512xf32>
    %c0_2 = arith.constant 0 : index
    %c0_3 = arith.constant 0 : index
    %4 = vector.load %arg2[%c0_2, %c0_3] : memref<1x512xf32, #tpu.memory_space<vmem>>, vector<1x512xf32>
    %cst = arith.constant dense<0.000000e+00> : vector<1x64xf32>
    %5 = tpu.matmul %4, %3, %cst {dimension_numbers = #tpu.dot_dimension_numbers<[1], [1], [0], [0], [0, 0, 1, 0], [], []>} : vector<1x512xf32>, vector<64x512xf32>, vector<1x64xf32> -> vector<1x64xf32>
    %c0_4 = arith.constant 0 : index
    %c0_5 = arith.constant 0 : index
    %6 = vector.load %arg6[%c0_4, %c0_5] : memref<1x512xf32, #tpu.memory_space<vmem>>, vector<1x512xf32>
    %cst_6 = arith.constant dense<0.000000e+00> : vector<1x512xf32>
    %7 = tpu.matmul %5, %3, %cst_6 {dimension_numbers = #tpu.dot_dimension_numbers<[1], [0], [0], [1], [0, 0, 1, 1], [], []>} : vector<1x64xf32>, vector<64x512xf32>, vector<1x512xf32> -> vector<1x512xf32>
    %8 = arith.addf %6, %7 : vector<1x512xf32>
    %c0_7 = arith.constant 0 : index
    %c0_8 = arith.constant 0 : index
    %9 = vector.load %arg6[%c0_7, %c0_8] : memref<1x512xf32, #tpu.memory_space<vmem>>, vector<1x512xf32>
    tpu.vector_store %arg6[%c0_7, %c0_8], %8 {strides = array<i32>} : memref<1x512xf32, #tpu.memory_space<vmem>>, vector<1x512xf32>,
    %c0_9 = arith.constant 0 : index
    %c0_10 = arith.constant 0 : index
    %10 = vector.load %arg7[%c0_9, %c0_10] : memref<1x1xf32, #tpu.memory_space<vmem>>, vector<1x1xf32>
    %11 = arith.mulf %5, %5 : vector<1x64xf32>
    %12 = vector.shape_cast %11 : vector<1x64xf32> to vector<1x1x64xf32>
    %cst_11 = arith.constant dense<0.000000e+00> : vector<1xf32>
    %13 = vector.multi_reduction <add>, %12, %cst_11 [1, 2] : vector<1x1x64xf32> to vector<1xf32>
    %14 = vector.shape_cast %13 : vector<1xf32> to vector<1x1x1xf32>
    %15 = vector.extract %14[0, 0, 0] : f32 from vector<1x1x1xf32>
    %16 = vector.broadcast %15 : f32 to vector<1x1xf32>
    %17 = arith.addf %10, %16 : vector<1x1xf32>
    %c0_12 = arith.constant 0 : index
    %c0_13 = arith.constant 0 : index
    %18 = vector.load %arg7[%c0_12, %c0_13] : memref<1x1xf32, #tpu.memory_space<vmem>>, vector<1x1xf32>
    tpu.vector_store %arg7[%c0_12, %c0_13], %17 {strides = array<i32>} : memref<1x1xf32, #tpu.memory_space<vmem>>, vector<1x1xf32>,
    %c3_i32 = arith.constant 3 : i32
    %19 = arith.cmpi eq, %arg0, %c3_i32 : i32
    %20 = arith.extui %19 : i1 to i32
    %c0_i32_14 = arith.constant 0 : i32
    %21 = arith.cmpi ne, %20, %c0_i32_14 : i32
    scf.if %21 {
      %c0_15 = arith.constant 0 : index
      %c0_16 = arith.constant 0 : index
      %22 = vector.load %arg7[%c0_15, %c0_16] : memref<1x1xf32, #tpu.memory_space<vmem>>, vector<1x1xf32>
      %23 = math.sqrt %22 : vector<1x1xf32>
      %cst_17 = arith.constant 9.99999996E-13 : f32
      %24 = vector.broadcast %cst_17 : f32 to vector<1x1xf32>
      %25 = arith.maximumf %23, %24 : vector<1x1xf32>
      %c0_18 = arith.constant 0 : index
      %c0_19 = arith.constant 0 : index
      %26 = vector.load %arg6[%c0_18, %c0_19] : memref<1x512xf32, #tpu.memory_space<vmem>>, vector<1x512xf32>
      %27 = vector.broadcast %25 : vector<1x1xf32> to vector<1x512xf32>
      %28 = arith.divf %26, %27 : vector<1x512xf32>
      %29 = arith.mulf %28, %28 : vector<1x512xf32>
      %30 = vector.shape_cast %29 : vector<1x512xf32> to vector<1x1x512xf32>
      %cst_20 = arith.constant dense<0.000000e+00> : vector<1xf32>
      %31 = vector.multi_reduction <add>, %30, %cst_20 [1, 2] : vector<1x1x512xf32> to vector<1xf32>
      %32 = vector.shape_cast %31 : vector<1xf32> to vector<1x1x1xf32>
      %33 = vector.extract %32[0, 0, 0] : f32 from vector<1x1x1xf32>
      %34 = vector.broadcast %33 : f32 to vector<1x1xf32>
      %35 = math.sqrt %34 : vector<1x1xf32>
      %cst_21 = arith.constant 9.99999996E-13 : f32
      %36 = vector.broadcast %cst_21 : f32 to vector<1x1xf32>
      %37 = arith.maximumf %35, %36 : vector<1x1xf32>
      %38 = vector.broadcast %37 : vector<1x1xf32> to vector<1x512xf32>
      %39 = arith.divf %28, %38 : vector<1x512xf32>
      %c0_22 = arith.constant 0 : index
      %c0_23 = arith.constant 0 : index
      %40 = vector.load %arg3[%c0_22, %c0_23] : memref<1x512xf32, #tpu.memory_space<vmem>>, vector<1x512xf32>
      tpu.vector_store %arg3[%c0_22, %c0_23], %39 {strides = array<i32>} : memref<1x512xf32, #tpu.memory_space<vmem>>, vector<1x512xf32>,
      %41 = arith.divf %34, %37 : vector<1x1xf32>
      %c0_24 = arith.constant 0 : index
      %c0_25 = arith.constant 0 : index
      %42 = vector.load %arg4[%c0_24, %c0_25] : memref<1x1xf32, #tpu.memory_space<vmem>>, vector<1x1xf32>
      tpu.vector_store %arg4[%c0_24, %c0_25], %41 {strides = array<i32>} : memref<1x1xf32, #tpu.memory_space<vmem>>, vector<1x1xf32>,
      %cst_26 = arith.constant 1.000000e+00 : f32
      %43 = vector.broadcast %cst_26 : f32 to vector<1x1xf32>
      %44 = arith.divf %43, %41 : vector<1x1xf32>
      %c0_27 = arith.constant 0 : index
      %c0_28 = arith.constant 0 : index
      %45 = vector.load %arg5[%c0_27, %c0_28] : memref<1x1xf32, #tpu.memory_space<vmem>>, vector<1x1xf32>
      tpu.vector_store %arg5[%c0_27, %c0_28], %44 {strides = array<i32>} : memref<1x1xf32, #tpu.memory_space<vmem>>, vector<1x1xf32>,
    } else {
    }
    return
  }
  func.func @transform_0(%arg0: i32) -> (i32, i32) {
    %c0_i32 = arith.constant 0 : i32
    %c0_i32_0 = arith.constant 0 : i32
    return %arg0, %c0_i32 : i32, i32
  }
  func.func @transform_1(%arg0: i32) -> (i32, i32) {
    %c0_i32 = arith.constant 0 : i32
    %c0_i32_0 = arith.constant 0 : i32
    %c0_i32_1 = arith.constant 0 : i32
    return %c0_i32, %c0_i32_0 : i32, i32
  }
  func.func @transform_2(%arg0: i32) -> (i32, i32) {
    %c0_i32 = arith.constant 0 : i32
    %c0_i32_0 = arith.constant 0 : i32
    %c0_i32_1 = arith.constant 0 : i32
    return %c0_i32, %c0_i32_0 : i32, i32
  }
  func.func @transform_3(%arg0: i32) -> (i32, i32) {
    %c0_i32 = arith.constant 0 : i32
    %c0_i32_0 = arith.constant 0 : i32
    %c0_i32_1 = arith.constant 0 : i32
    return %c0_i32, %c0_i32_0 : i32, i32
  }
  func.func @transform_4(%arg0: i32) -> (i32, i32) {
    %c0_i32 = arith.constant 0 : i32
    %c0_i32_0 = arith.constant 0 : i32
    %c0_i32_1 = arith.constant 0 : i32
    return %c0_i32, %c0_i32_0 : i32, i32
  }
}

</mosaic_0001>

<llo_original>
// kernel: spectral_normed_weight.2
$region0: #{spectral_normed_weight.2}
  #allocation0 [shape = 'u32[]', space=smem, size = 0x4, offset = 0x4, fixed_abs, tag = 'smem constant byte address 0x4 - core index']
  #allocation1 [shape = 'u32[144,128]{1,0:T(1,128)}', space=vmem, size = 0x12000, scoped, tag = 'internal scratch']
  #allocation2 [shape = 'f32[1,512]{1,0:T(1,128)}', space=vmem, size = 0x800, scoped, tag = 'scratch operand']
  #allocation3 [shape = 'f32[1,1]{1,0:T(1,128)}', space=vmem, size = 0x200, scoped, tag = 'scratch operand']
  %s0 = inlined_call_operand.hbm [shape: f32[256,512], index: 0, kind: input, shape index: {}]
  %s1 = inlined_call_operand.hbm [shape: f32[1,512], index: 1, kind: input, shape index: {}]
  %s2 = inlined_call_operand.hbm [shape: f32[1,512], index: 2, kind: output, shape index: {0}]
  %s3 = inlined_call_operand.hbm [shape: f32[1,1], index: 3, kind: output, shape index: {1}]
  %s4 = inlined_call_operand.hbm [shape: f32[1,1], index: 4, kind: output, shape index: {2}]
  %5 = xla_tuple %s2, %s3, %s4
  %s6 = sld [smem:[#allocation0]]
  $region73: #{spectral_normed_weight.2} parent=0
    _
  %s8 = ssub.s32 1, %s6
  %s9 = scalar_select 0, %s8, %s6
  $region1: #{spectral_normed_weight.2} parent=0
    #allocation4 [shape = 'u8[262144]{0}', space=vmem, size = 0x40000, scoped, tag = 'input window, operand 0']
    #allocation5 [shape = 's32[2]{0}', space=sflag, size = 0x8, scoped, tag = 'scoped memory for spectral_normed_weight.2']
    #allocation6 [shape = 's32[2]{0}', space=sflag, size = 0x8, scoped, tag = 'scoped memory for spectral_normed_weight.2']
    #allocation7 [shape = 'u8[2048]{0}', space=vmem, size = 0x800, scoped, tag = 'input window, operand 1, single buffered']
    #allocation8 [shape = 's32[1]{0}', space=sflag, size = 0x4, scoped, tag = 'scoped memory for spectral_normed_weight.2']
    #allocation9 [shape = 'u8[2048]{0}', space=vmem, size = 0x800, scoped, tag = 'output window, operand 0, single buffered']
    #allocation10 [shape = 'u8[512]{0}', space=vmem, size = 0x400, scoped, tag = 'output window, operand 1, single buffered']
    #allocation11 [shape = 's32[1]{0}', space=sflag, size = 0x4, scoped, tag = 'scoped memory for spectral_normed_weight.2']
    #allocation12 [shape = 'u8[512]{0}', space=vmem, size = 0x400, scoped, tag = 'output window, operand 2, single buffered']
    %10 = vsyncpa [#allocation5], 0
    %s11 = scalar_lea.sflag [#allocation5], 1
    %12 = vsyncpa %s11, 0
    %13 = vsyncpa [#allocation8], 0
    %14 = vsyncpa [#allocation6], 0
    %15 = vsyncpa [#allocation11], 0
    loop: start=0, step=1, limit=6
    $region2: #{spectral_normed_weight.2} parent=1 // loop_pre_header
      _
    $region3: #{spectral_normed_weight.2} parent=1 // loop_header
      %s17 = sphi 0, %s21
      %p18 = scmp.ge.s32.totalorder %s17, 6
      %s27 = sphi 0, %s29
      %s30 = sphi 0, %s27
      %s31 = sphi 0, %s30
      %s47 = sphi 0, %s31
      %s51 = sphi 0, %s51
      %s53 = sphi 0, %s51
      %s54 = sphi 0, %s53
      %s68 = sphi 0, %s54
      %s72 = sphi 0, %s72
      %s74 = sphi 0, %s72
      %s75 = sphi 0, %s74
      %s89 = sphi 0, %s75
      %s93 = sphi 0, %s93
      %s95 = sphi 0, %s93
      %s96 = sphi 0, %s95
      %s110 = sphi 0, %s96
      %s114 = sphi 0, %s114
      %s116 = sphi 0, %s114
      %s117 = sphi 0, %s116
      %s131 = sphi 0, %s117
    $region4: #{spectral_normed_weight.2} parent=1 // loop_header_branch
      %20 = sbr.rel (%p18) target = $region8
    $region5: #{spectral_normed_weight.2} parent=1 // loop_body
      %s22 = ssub.s32 %s17, 1
      %s23 = ssub.s32 %s17, 2
      %s24 = sadd.s32 %s17, 1
      %s25 = ssub.s32 %s17, %s24
      %p26 = scmp.eq.s32.totalorder %s25, 0
      %s28 = sadd.s32 %s27, 1
      %s29 = scalar_select %p26, %s27, %s28
      %p32 = pneg %p26
      %p33 = scmp.eq.s32.totalorder %s17, 3
      %p34 = por %p32, %p33
      %p35 = scmp.ne.s32.totalorder %s27, %s30
      %p36 = scmp.eq.s32.totalorder %s17, 0
      %p37 = por %p35, %p36
      %p38 = scmp.ne.s32.totalorder %s27, %s30
      %p39 = scmp.eq.s32.totalorder %s22, 3
      %p40 = por %p38, %p39
      %p41 = scmp.ne.s32.totalorder %s30, %s31
      %p42 = scmp.eq.s32.totalorder %s22, 0
      %p43 = por %p41, %p42
      %p44 = scmp.ne.s32.totalorder %s30, %s31
      %p45 = scmp.eq.s32.totalorder %s23, 3
      %p46 = por %p44, %p45
      %p48 = scmp.ne.s32.totalorder %s31, %s47
      %p49 = scmp.eq.s32.totalorder %s23, 0
      %p50 = por %p48, %p49
      %s52 = sadd.s32 %s51, 1
      %p55 = scmp.eq.s32.totalorder %s17, 3
      %p56 = scmp.ne.s32.totalorder %s51, %s53
      %p57 = scmp.eq.s32.totalorder %s17, 0
      %p58 = por %p56, %p57
      %p59 = scmp.ne.s32.totalorder %s51, %s53
      %p60 = scmp.eq.s32.totalorder %s22, 3
      %p61 = por %p59, %p60
      %p62 = scmp.ne.s32.totalorder %s53, %s54
      %p63 = scmp.eq.s32.totalorder %s22, 0
      %p64 = por %p62, %p63
      %p65 = scmp.ne.s32.totalorder %s53, %s54
      %p66 = scmp.eq.s32.totalorder %s23, 3
      %p67 = por %p65, %p66
      %p69 = scmp.ne.s32.totalorder %s54, %s68
      %p70 = scmp.eq.s32.totalorder %s23, 0
      %p71 = por %p69, %p70
      %s73 = sadd.s32 %s72, 1
      %p76 = scmp.eq.s32.totalorder %s17, 3
      %p77 = scmp.ne.s32.totalorder %s72, %s74
      %p78 = scmp.eq.s32.totalorder %s17, 0
      %p79 = por %p77, %p78
      %p80 = scmp.ne.s32.totalorder %s72, %s74
      %p81 = scmp.eq.s32.totalorder %s22, 3
      %p82 = por %p80, %p81
      %p83 = scmp.ne.s32.totalorder %s74, %s75
      %p84 = scmp.eq.s32.totalorder %s22, 0
      %p85 = por %p83, %p84
      %p86 = scmp.ne.s32.totalorder %s74, %s75
      %p87 = scmp.eq.s32.totalorder %s23, 3
      %p88 = por %p86, %p87
      %p90 = scmp.ne.s32.totalorder %s75, %s89
      %p91 = scmp.eq.s32.totalorder %s23, 0
      %p92 = por %p90, %p91
      %s94 = sadd.s32 %s93, 1
      %p97 = scmp.eq.s32.totalorder %s17, 3
      %p98 = scmp.ne.s32.totalorder %s93, %s95
      %p99 = scmp.eq.s32.totalorder %s17, 0
      %p100 = por %p98, %p99
      %p101 = scmp.ne.s32.totalorder %s93, %s95
      %p102 = scmp.eq.s32.totalorder %s22, 3
      %p103 = por %p101, %p102
      %p104 = scmp.ne.s32.totalorder %s95, %s96
      %p105 = scmp.eq.s32.totalorder %s22, 0
      %p106 = por %p104, %p105
      %p107 = scmp.ne.s32.totalorder %s95, %s96
      %p108 = scmp.eq.s32.totalorder %s23, 3
      %p109 = por %p107, %p108
      %p111 = scmp.ne.s32.totalorder %s96, %s110
      %p112 = scmp.eq.s32.totalorder %s23, 0
      %p113 = por %p111, %p112
      %s115 = sadd.s32 %s114, 1
      %p118 = scmp.eq.s32.totalorder %s17, 3
      %p119 = scmp.ne.s32.totalorder %s114, %s116
      %p120 = scmp.eq.s32.totalorder %s17, 0
      %p121 = por %p119, %p120
      %p122 = scmp.ne.s32.totalorder %s114, %s116
      %p123 = scmp.eq.s32.totalorder %s22, 3
      %p124 = por %p122, %p123
      %p125 = scmp.ne.s32.totalorder %s116, %s117
      %p126 = scmp.eq.s32.totalorder %s22, 0
      %p127 = por %p125, %p126
      %p128 = scmp.ne.s32.totalorder %s116, %s117
      %p129 = scmp.eq.s32.totalorder %s23, 3
      %p130 = por %p128, %p129
      %p132 = scmp.ne.s32.totalorder %s117, %s131
      %p133 = scmp.eq.s32.totalorder %s23, 0
      %p134 = por %p132, %p133
      %p135 = scmp.le.s32.totalorder 1, %s17
      %p136 = scmp.lt.s32.totalorder %s17, 5
      %p137 = pnand %p135, %p136
      %p138 = pneg %p137
      // Predicated region
      $region9: #{spectral_normed_weight.2} parent=5 // pred_check
        _
      $region10: #{spectral_normed_weight.2} parent=5 // pred_check_branch
        %140 = sbr.rel (%p137) target = $region12
      $region11: #{spectral_normed_weight.2} parent=5 // pred_region
        %s141 = ssub.s32 %s17, 1
        // Predicated region
        $region13: #{spectral_normed_weight.2} parent=11 // pred_check
          %p142 = pneg %p64
        $region14: #{spectral_normed_weight.2} parent=11 // pred_check_branch
          %144 = sbr.rel (%p142) target = $region16
        $region15: #{spectral_normed_weight.2} parent=11 // pred_region
          %s146 = ssub.s32 64, 64
          %147 = vsyncadd [#allocation8], %s146
          %s149 = sshll.u32 [#allocation7], 4
          %s150 = int_to_ptr.vmem [resolvable:$true] %s149
          %152 = dma.hbm_to_vmem [thread:$0]  %s1, 64, %s150, [#allocation8]
        $region16: #{spectral_normed_weight.2} parent=11 // pred_fallthru
          _
      $region12: #{spectral_normed_weight.2} parent=5 // pred_fallthru
        _
      %p153 = scmp.lt.s32.totalorder %s17, 4
      // Predicated region
      $region17: #{spectral_normed_weight.2} parent=5 // pred_check
        %p154 = pneg %p153
      $region18: #{spectral_normed_weight.2} parent=5 // pred_check_branch
        %156 = sbr.rel (%p154) target = $region20
      $region19: #{spectral_normed_weight.2} parent=5 // pred_region
        // Predicated region
        $region21: #{spectral_normed_weight.2} parent=19 // pred_check
          %p157 = pneg %p37
        $region22: #{spectral_normed_weight.2} parent=19 // pred_check_branch
          %159 = sbr.rel (%p157) target = $region24
        $region23: #{spectral_normed_weight.2} parent=19 // pred_region
          %s160 = sand.u32 %s27, 1
          %s161 = scalar_lea.sflag [#allocation5], %s160
          %s162 = sand.u32 %s27, 1
          %s163 = smul.addr %s162, 256
          %s164 = scalar_lea.vmem [#allocation4], %s163
          %s165 = smul.u32 8, %s17
          %s167 = ssub.s32 4096, 4096
          %168 = vsyncadd %s161, %s167
          %s169 = smul.addr %s165, 4
          %s170 = smul.addr %s169, 128
          %s171 = scalar_lea.hbm %s0, %s170
          %s172 = sshll.u32 %s164, 4
          %s173 = int_to_ptr.vmem [resolvable:$true] %s172
          %178 = dma.hbm_to_vmem [thread:$0]  %s171, 4096, %s173, %s161, 512, 512, 32
        $region24: #{spectral_normed_weight.2} parent=19 // pred_fallthru
          _
      $region20: #{spectral_normed_weight.2} parent=5 // pred_fallthru
        _
      %p179 = scmp.le.s32.totalorder 1, %s17
      %p180 = scmp.lt.s32.totalorder %s17, 5
      %p181 = pnand %p179, %p180
      %p182 = pneg %p181
      // Predicated region
      $region25: #{spectral_normed_weight.2} parent=5 // pred_check
        _
      $region26: #{spectral_normed_weight.2} parent=5 // pred_check_branch
        %184 = sbr.rel (%p181) target = $region28
      $region27: #{spectral_normed_weight.2} parent=5 // pred_region
        %s185 = ssub.s32 %s17, 1
        %s186 = sand.u32 %s30, 1
        %s187 = scalar_lea.sflag [#allocation5], %s186
        %s188 = sand.u32 %s30, 1
        %s189 = smul.addr %s188, 256
        %s190 = scalar_lea.vmem [#allocation4], %s189
        // Predicated region
        $region29: #{spectral_normed_weight.2} parent=27 // pred_check
          %p191 = pneg %p43
        $region30: #{spectral_normed_weight.2} parent=27 // pred_check_branch
          %193 = sbr.rel (%p191) target = $region32
        $region31: #{spectral_normed_weight.2} parent=27 // pred_region
          %194 = dma.done %s187, 4096
        $region32: #{spectral_normed_weight.2} parent=27 // pred_fallthru
          _
        // Predicated region
        $region33: #{spectral_normed_weight.2} parent=27 // pred_check
          %p195 = pneg %p64
        $region34: #{spectral_normed_weight.2} parent=27 // pred_check_branch
          %197 = sbr.rel (%p195) target = $region36
        $region35: #{spectral_normed_weight.2} parent=27 // pred_region
          %198 = dma.done [#allocation8], 64
        $region36: #{spectral_normed_weight.2} parent=27 // pred_fallthru
          _
        %s199 = sand.u32 %s30, 1
        %s200 = scalar_lea.sflag [#allocation5], %s199
        %s201 = sand.u32 %s30, 1
        %s202 = smul.addr %s201, 256
        %s203 = scalar_lea.vmem [#allocation4], %s202
        %p204 = pneg %p43
        %p205 = pneg %p40
        %p206 = pneg %p64
        %p207 = pneg %p61
        %p208 = pneg %p85
        %p209 = pneg %p82
        %p210 = pneg %p106
        %p211 = pneg %p103
        %p212 = pneg %p127
        %p213 = pneg %p124
        %s214 = smul.u32 8, %s22
        %p215 = scmp.eq.s32.totalorder %s22, 0
        // Predicated region
        $region37: #{spectral_normed_weight.2} parent=27 // pred_check
          %p216 = pneg %p215
        $region38: #{spectral_normed_weight.2} parent=27 // pred_check_branch
          %218 = sbr.rel (%p216) target = $region40
        $region39: #{spectral_normed_weight.2} parent=27 // pred_region
          %v219 = vlaneseq
          %vm220 = vcmp.ge.s32.totalorder %v219, 0
          %vm221 = vcmp.lt.s32.totalorder %v219, 512
          %vm222 = vmand %vm220, %vm221
          %223 = vst.msk [vmem:[#allocation2] sm:$0xf] %vm222, 0.0
          %vm224 = vcmask 0
          %225 = vst.msk [vmem:[#allocation3] sm:$0x1] %vm224, 0.0
        $region40: #{spectral_normed_weight.2} parent=27 // pred_fallthru
          _
        %v226 = vld [vmem:[%s190] sm:$0xff]
        %v227 = vld [vmem:[%s190 + $0x8] sm:$0xff]
        %v228 = vld [vmem:[%s190 + $0x10] sm:$0xff]
        %v229 = vld [vmem:[%s190 + $0x18] sm:$0xff]
        %v230 = vld [vmem:[%s190 + $0x20] sm:$0xff]
        %v231 = vld [vmem:[%s190 + $0x28] sm:$0xff]
        %v232 = vld [vmem:[%s190 + $0x30] sm:$0xff]
        %v233 = vld [vmem:[%s190 + $0x38] sm:$0xff]
        %v234 = vld [vmem:[%s190 + $0x40] sm:$0xff]
        %v235 = vld [vmem:[%s190 + $0x48] sm:$0xff]
        %v236 = vld [vmem:[%s190 + $0x50] sm:$0xff]
        %v237 = vld [vmem:[%s190 + $0x58] sm:$0xff]
        %v238 = vld [vmem:[%s190 + $0x60] sm:$0xff]
        %v239 = vld [vmem:[%s190 + $0x68] sm:$0xff]
        %v240 = vld [vmem:[%s190 + $0x70] sm:$0xff]
        %v241 = vld [vmem:[%s190 + $0x78] sm:$0xff]
        %v242 = vld [vmem:[%s190 + $0x80] sm:$0xff]
        %v243 = vld [vmem:[%s190 + $0x88] sm:$0xff]
        %v244 = vld [vmem:[%s190 + $0x90] sm:$0xff]
        %v245 = vld [vmem:[%s190 + $0x98] sm:$0xff]
        %v246 = vld [vmem:[%s190 + $0xa0] sm:$0xff]
        %v247 = vld [vmem:[%s190 + $0xa8] sm:$0xff]
        %v248 = vld [vmem:[%s190 + $0xb0] sm:$0xff]
        %v249 = vld [vmem:[%s190 + $0xb8] sm:$0xff]
        %v250 = vld [vmem:[%s190 + $0xc0] sm:$0xff]
        %v251 = vld [vmem:[%s190 + $0xc8] sm:$0xff]
        %v252 = vld [vmem:[%s190 + $0xd0] sm:$0xff]
        %v253 = vld [vmem:[%s190 + $0xd8] sm:$0xff]
        %v254 = vld [vmem:[%s190 + $0xe0] sm:$0xff]
        %v255 = vld [vmem:[%s190 + $0xe8] sm:$0xff]
        %v256 = vld [vmem:[%s190 + $0xf0] sm:$0xff]
        %v257 = vld [vmem:[%s190 + $0xf8] sm:$0xff]
        %v258 = vld [vmem:[#allocation7] sm:$0xf]
        %v260 = vlaneseq
        %v261 = vshrl.u32 %v260, 7
        %v262 = vsub.s32 0, %v261
        %v263 = vrot.slane %v258, %v262
        %v264 = vlaneseq
        %v265 = vshrl.u32 %v264, 7
        %v266 = vsub.s32 1, %v265
        %v267 = vrot.slane %v258, %v266
        %v268 = vlaneseq
        %v269 = vshrl.u32 %v268, 7
        %v270 = vsub.s32 2, %v269
        %v271 = vrot.slane %v258, %v270
        %v272 = vlaneseq
        %v273 = vshrl.u32 %v272, 7
        %v274 = vsub.s32 3, %v273
        %v275 = vrot.slane %v258, %v274
        %280 = vmatprep.subr.mxu0 0.0
        %281 = vmatpush1.xpose.msra.mxu0 0.0
        %282 = vmatprep.subr.mxu0 0.0
        %283 = vmatpush1.xpose.msra.mxu0 0.0
        %284 = vmatprep.subr.mxu0 0.0
        %285 = vmatpush1.xpose.msra.mxu0 0.0
        %286 = vmatprep.subr.mxu0 0.0
        %287 = vmatpush1.xpose.msra.mxu0 0.0
        %288 = vmatprep.subr.mxu0 0.0
        %289 = vmatpush1.xpose.msra.mxu0 0.0
        %290 = vmatprep.subr.mxu0 0.0
        %291 = vmatpush1.xpose.msra.mxu0 0.0
        %292 = vmatprep.subr.mxu0 0.0
        %293 = vmatpush1.xpose.msra.mxu0 0.0
        %294 = vmatprep.subr.mxu0 0.0
        %295 = vmatpush1.xpose.msra.mxu0 0.0
        %296 = vmatprep.subr.mxu0 %v255
        %297 = vmatpush1.xpose.msra.mxu0 %v254
        %298 = vmatprep.subr.mxu0 %v251
        %299 = vmatpush1.xpose.msra.mxu0 %v250
        %300 = vmatprep.subr.mxu0 %v247
        %301 = vmatpush1.xpose.msra.mxu0 %v246
        %302 = vmatprep.subr.mxu0 %v243
        %303 = vmatpush1.xpose.msra.mxu0 %v242
        %304 = vmatprep.subr.mxu0 %v239
        %305 = vmatpush1.xpose.msra.mxu0 %v238
        %306 = vmatprep.subr.mxu0 %v235
        %307 = vmatpush1.xpose.msra.mxu0 %v234
        %308 = vmatprep.subr.mxu0 %v231
        %309 = vmatpush1.xpose.msra.mxu0 %v230
        %310 = vmatprep.subr.mxu0 %v227
        %311 = vmatpush1.xpose.msra.mxu0 %v226
        %312 = vmatprep.subr.mxu0 0.0
        %313 = vmatpush2.xpose.msra.mxu0 0.0
        %314 = vmatprep.subr.mxu0 0.0
        %315 = vmatpush2.xpose.msra.mxu0 0.0
        %316 = vmatprep.subr.mxu0 0.0
        %317 = vmatpush2.xpose.msra.mxu0 0.0
        %318 = vmatprep.subr.mxu0 0.0
        %319 = vmatpush2.xpose.msra.mxu0 0.0
        %320 = vmatprep.subr.mxu0 0.0
        %321 = vmatpush2.xpose.msra.mxu0 0.0
        %322 = vmatprep.subr.mxu0 0.0
        %323 = vmatpush2.xpose.msra.mxu0 0.0
        %324 = vmatprep.subr.mxu0 0.0
        %325 = vmatpush2.xpose.msra.mxu0 0.0
        %326 = vmatprep.subr.mxu0 0.0
        %327 = vmatpush2.xpose.msra.mxu0 0.0
        %328 = vmatprep.subr.mxu0 0.0
        %329 = vmatpush2.xpose.msra.mxu0 0.0
        %330 = vmatprep.subr.mxu0 0.0
        %331 = vmatpush2.xpose.msra.mxu0 0.0
        %332 = vmatprep.subr.mxu0 0.0
        %333 = vmatpush2.xpose.msra.mxu0 0.0
        %334 = vmatprep.subr.mxu0 0.0
        %335 = vmatpush2.xpose.msra.mxu0 0.0
        %336 = vmatprep.subr.mxu0 0.0
        %337 = vmatpush2.xpose.msra.mxu0 0.0
        %338 = vmatprep.subr.mxu0 0.0
        %339 = vmatpush2.xpose.msra.mxu0 0.0
        %340 = vmatprep.subr.mxu0 0.0
        %341 = vmatpush2.xpose.msra.mxu0 0.0
        %342 = vmatprep.subr.mxu0 0.0
        %343 = vmatpush2.xpose.msra.mxu0 0.0
        %344 = vmatprep.mubr.f32.mxu0 %v267
        %345 = vmatmul.mubr.f32.gmra.mxu0 %v263
        %v346 = vpop.f32.mrf.mxu0
        %v347 = vadd.f32 0.0, %v346
        %v348 = vpop.f32.mrf.mxu0
        %349 = vdwg.mxu0
        %350 = vmatprep.subr.mxu0 0.0
        %351 = vmatpush1.xpose.msra.mxu0 0.0
        %352 = vmatprep.subr.mxu0 0.0
        %353 = vmatpush1.xpose.msra.mxu0 0.0
        %354 = vmatprep.subr.mxu0 0.0
        %355 = vmatpush1.xpose.msra.mxu0 0.0
        %356 = vmatprep.subr.mxu0 0.0
        %357 = vmatpush1.xpose.msra.mxu0 0.0
        %358 = vmatprep.subr.mxu0 0.0
        %359 = vmatpush1.xpose.msra.mxu0 0.0
        %360 = vmatprep.subr.mxu0 0.0
        %361 = vmatpush1.xpose.msra.mxu0 0.0
        %362 = vmatprep.subr.mxu0 0.0
        %363 = vmatpush1.xpose.msra.mxu0 0.0
        %364 = vmatprep.subr.mxu0 0.0
        %365 = vmatpush1.xpose.msra.mxu0 0.0
        %366 = vmatprep.subr.mxu0 %v257
        %367 = vmatpush1.xpose.msra.mxu0 %v256
        %368 = vmatprep.subr.mxu0 %v253
        %369 = vmatpush1.xpose.msra.mxu0 %v252
        %370 = vmatprep.subr.mxu0 %v249
        %371 = vmatpush1.xpose.msra.mxu0 %v248
        %372 = vmatprep.subr.mxu0 %v245
        %373 = vmatpush1.xpose.msra.mxu0 %v244
        %374 = vmatprep.subr.mxu0 %v241
        %375 = vmatpush1.xpose.msra.mxu0 %v240
        %376 = vmatprep.subr.mxu0 %v237
        %377 = vmatpush1.xpose.msra.mxu0 %v236
        %378 = vmatprep.subr.mxu0 %v233
        %379 = vmatpush1.xpose.msra.mxu0 %v232
        %380 = vmatprep.subr.mxu0 %v229
        %381 = vmatpush1.xpose.msra.mxu0 %v228
        %382 = vmatprep.subr.mxu0 0.0
        %383 = vmatpush2.xpose.msra.mxu0 0.0
        %384 = vmatprep.subr.mxu0 0.0
        %385 = vmatpush2.xpose.msra.mxu0 0.0
        %386 = vmatprep.subr.mxu0 0.0
        %387 = vmatpush2.xpose.msra.mxu0 0.0
        %388 = vmatprep.subr.mxu0 0.0
        %389 = vmatpush2.xpose.msra.mxu0 0.0
        %390 = vmatprep.subr.mxu0 0.0
        %391 = vmatpush2.xpose.msra.mxu0 0.0
        %392 = vmatprep.subr.mxu0 0.0
        %393 = vmatpush2.xpose.msra.mxu0 0.0
        %394 = vmatprep.subr.mxu0 0.0
        %395 = vmatpush2.xpose.msra.mxu0 0.0
        %396 = vmatprep.subr.mxu0 0.0
        %397 = vmatpush2.xpose.msra.mxu0 0.0
        %398 = vmatprep.subr.mxu0 0.0
        %399 = vmatpush2.xpose.msra.mxu0 0.0
        %400 = vmatprep.subr.mxu0 0.0
        %401 = vmatpush2.xpose.msra.mxu0 0.0
        %402 = vmatprep.subr.mxu0 0.0
        %403 = vmatpush2.xpose.msra.mxu0 0.0
        %404 = vmatprep.subr.mxu0 0.0
        %405 = vmatpush2.xpose.msra.mxu0 0.0
        %406 = vmatprep.subr.mxu0 0.0
        %407 = vmatpush2.xpose.msra.mxu0 0.0
        %408 = vmatprep.subr.mxu0 0.0
        %409 = vmatpush2.xpose.msra.mxu0 0.0
        %410 = vmatprep.subr.mxu0 0.0
        %411 = vmatpush2.xpose.msra.mxu0 0.0
        %412 = vmatprep.subr.mxu0 0.0
        %413 = vmatpush2.xpose.msra.mxu0 0.0
        %414 = vmatprep.mubr.f32.mxu0 %v275
        %415 = vmatmul.mubr.f32.gmra.mxu0 %v271
        %v416 = vpop.f32.mrf.mxu0
        %v417 = vadd.f32 %v347, %v416
        %v418 = vpop.f32.mrf.mxu0
        %419 = vdwg.mxu0
        %v420 = vld [vmem:[#allocation2] sm:$0xf]
        %vm421 = vcmask 523264
        %v423 = vsel %vm421, %v417, 0
        %425 = vmatprep.subr.mxu0 0.0
        %426 = vmatpush1.msra.mxu0 0.0
        %427 = vmatprep.subr.mxu0 0.0
        %428 = vmatpush1.msra.mxu0 0.0
        %429 = vmatprep.subr.mxu0 0.0
        %430 = vmatpush1.msra.mxu0 0.0
        %431 = vmatprep.subr.mxu0 0.0
        %432 = vmatpush1.msra.mxu0 0.0
        %433 = vmatprep.subr.mxu0 0.0
        %434 = vmatpush1.msra.mxu0 0.0
        %435 = vmatprep.subr.mxu0 0.0
        %436 = vmatpush1.msra.mxu0 0.0
        %437 = vmatprep.subr.mxu0 0.0
        %438 = vmatpush1.msra.mxu0 0.0
        %439 = vmatprep.subr.mxu0 0.0
        %440 = vmatpush1.msra.mxu0 0.0
        %441 = vmatprep.subr.mxu0 %v255
        %442 = vmatpush1.msra.mxu0 %v254
        %443 = vmatprep.subr.mxu0 %v251
        %444 = vmatpush1.msra.mxu0 %v250
        %445 = vmatprep.subr.mxu0 %v247
        %446 = vmatpush1.msra.mxu0 %v246
        %447 = vmatprep.subr.mxu0 %v243
        %448 = vmatpush1.msra.mxu0 %v242
        %449 = vmatprep.subr.mxu0 %v239
        %450 = vmatpush1.msra.mxu0 %v238
        %451 = vmatprep.subr.mxu0 %v235
        %452 = vmatpush1.msra.mxu0 %v234
        %453 = vmatprep.subr.mxu0 %v231
        %454 = vmatpush1.msra.mxu0 %v230
        %455 = vmatprep.subr.mxu0 %v227
        %456 = vmatpush1.msra.mxu0 %v226
        %457 = vmatprep.subr.mxu0 0.0
        %458 = vmatpush2.msra.mxu0 0.0
        %459 = vmatprep.subr.mxu0 0.0
        %460 = vmatpush2.msra.mxu0 0.0
        %461 = vmatprep.subr.mxu0 0.0
        %462 = vmatpush2.msra.mxu0 0.0
        %463 = vmatprep.subr.mxu0 0.0
        %464 = vmatpush2.msra.mxu0 0.0
        %465 = vmatprep.subr.mxu0 0.0
        %466 = vmatpush2.msra.mxu0 0.0
        %467 = vmatprep.subr.mxu0 0.0
        %468 = vmatpush2.msra.mxu0 0.0
        %469 = vmatprep.subr.mxu0 0.0
        %470 = vmatpush2.msra.mxu0 0.0
        %471 = vmatprep.subr.mxu0 0.0
        %472 = vmatpush2.msra.mxu0 0.0
        %473 = vmatprep.subr.mxu0 0.0
        %474 = vmatpush2.msra.mxu0 0.0
        %475 = vmatprep.subr.mxu0 0.0
        %476 = vmatpush2.msra.mxu0 0.0
        %477 = vmatprep.subr.mxu0 0.0
        %478 = vmatpush2.msra.mxu0 0.0
        %479 = vmatprep.subr.mxu0 0.0
        %480 = vmatpush2.msra.mxu0 0.0
        %481 = vmatprep.subr.mxu0 0.0
        %482 = vmatpush2.msra.mxu0 0.0
        %483 = vmatprep.subr.mxu0 0.0
        %484 = vmatpush2.msra.mxu0 0.0
        %485 = vmatprep.subr.mxu0 0.0
        %486 = vmatpush2.msra.mxu0 0.0
        %487 = vmatprep.subr.mxu0 0.0
        %488 = vmatpush2.msra.mxu0 0.0
        %489 = vmatprep.mubr.f32.mxu0 0.0
        %490 = vmatmul.mubr.f32.gmra.mxu0 %v423
        %v491 = vpop.f32.mrf.mxu0
        %v492 = vadd.f32 0.0, %v491
        %v493 = vpop.f32.mrf.mxu0
        %v494 = vadd.f32 0.0, %v493
        %495 = vdwg.mxu0
        %496 = vmatprep.subr.mxu0 0.0
        %497 = vmatpush1.msra.mxu0 0.0
        %498 = vmatprep.subr.mxu0 0.0
        %499 = vmatpush1.msra.mxu0 0.0
        %500 = vmatprep.subr.mxu0 0.0
        %501 = vmatpush1.msra.mxu0 0.0
        %502 = vmatprep.subr.mxu0 0.0
        %503 = vmatpush1.msra.mxu0 0.0
        %504 = vmatprep.subr.mxu0 0.0
        %505 = vmatpush1.msra.mxu0 0.0
        %506 = vmatprep.subr.mxu0 0.0
        %507 = vmatpush1.msra.mxu0 0.0
        %508 = vmatprep.subr.mxu0 0.0
        %509 = vmatpush1.msra.mxu0 0.0
        %510 = vmatprep.subr.mxu0 0.0
        %511 = vmatpush1.msra.mxu0 0.0
        %512 = vmatprep.subr.mxu0 %v257
        %513 = vmatpush1.msra.mxu0 %v256
        %514 = vmatprep.subr.mxu0 %v253
        %515 = vmatpush1.msra.mxu0 %v252
        %516 = vmatprep.subr.mxu0 %v249
        %517 = vmatpush1.msra.mxu0 %v248
        %518 = vmatprep.subr.mxu0 %v245
        %519 = vmatpush1.msra.mxu0 %v244
        %520 = vmatprep.subr.mxu0 %v241
        %521 = vmatpush1.msra.mxu0 %v240
        %522 = vmatprep.subr.mxu0 %v237
        %523 = vmatpush1.msra.mxu0 %v236
        %524 = vmatprep.subr.mxu0 %v233
        %525 = vmatpush1.msra.mxu0 %v232
        %526 = vmatprep.subr.mxu0 %v229
        %527 = vmatpush1.msra.mxu0 %v228
        %528 = vmatprep.subr.mxu0 0.0
        %529 = vmatpush2.msra.mxu0 0.0
        %530 = vmatprep.subr.mxu0 0.0
        %531 = vmatpush2.msra.mxu0 0.0
        %532 = vmatprep.subr.mxu0 0.0
        %533 = vmatpush2.msra.mxu0 0.0
        %534 = vmatprep.subr.mxu0 0.0
        %535 = vmatpush2.msra.mxu0 0.0
        %536 = vmatprep.subr.mxu0 0.0
        %537 = vmatpush2.msra.mxu0 0.0
        %538 = vmatprep.subr.mxu0 0.0
        %539 = vmatpush2.msra.mxu0 0.0
        %540 = vmatprep.subr.mxu0 0.0
        %541 = vmatpush2.msra.mxu0 0.0
        %542 = vmatprep.subr.mxu0 0.0
        %543 = vmatpush2.msra.mxu0 0.0
        %544 = vmatprep.subr.mxu0 0.0
        %545 = vmatpush2.msra.mxu0 0.0
        %546 = vmatprep.subr.mxu0 0.0
        %547 = vmatpush2.msra.mxu0 0.0
        %548 = vmatprep.subr.mxu0 0.0
        %549 = vmatpush2.msra.mxu0 0.0
        %550 = vmatprep.subr.mxu0 0.0
        %551 = vmatpush2.msra.mxu0 0.0
        %552 = vmatprep.subr.mxu0 0.0
        %553 = vmatpush2.msra.mxu0 0.0
        %554 = vmatprep.subr.mxu0 0.0
        %555 = vmatpush2.msra.mxu0 0.0
        %556 = vmatprep.subr.mxu0 0.0
        %557 = vmatpush2.msra.mxu0 0.0
        %558 = vmatprep.subr.mxu0 0.0
        %559 = vmatpush2.msra.mxu0 0.0
        %560 = vmatprep.mubr.f32.mxu0 0.0
        %561 = vmatmul.mubr.f32.gmra.mxu0 %v423
        %v562 = vpop.f32.mrf.mxu0
        %v563 = vadd.f32 0.0, %v562
        %v564 = vpop.f32.mrf.mxu0
        %v565 = vadd.f32 0.0, %v564
        %566 = vdwg.mxu0
        %v571 = vcombine.low %v492, %v494
        %v572 = vcombine.low %v563, %v565
        %v574 = vunpack.c.l.s4 1966171168
        %v575 = vunpack.c.0.s8 %v574
        %v576 = vlaneseq
        %v577 = vshrl.u32 %v576, 7
        %v578 = vsub.s32 %v575, %v577
        %v579 = vrot.slane %v571, %v578
        %v581 = vunpack.c.l.s4 1966171168
        %v582 = vunpack.c.0.s8 %v581
        %v583 = vlaneseq
        %v584 = vshrl.u32 %v583, 7
        %v585 = vsub.s32 %v582, %v584
        %v586 = vrot.slane %v572, %v585
        %v587 = vcombine.low %v579, %v586
        %v589 = vunpack.c.l.s4 1966171168
        %v590 = vunpack.c.0.s8 %v589
        %v591 = vlaneseq
        %v592 = vshrl.u32 %v591, 7
        %v593 = vsub.s32 %v590, %v592
        %v594 = vrot.slane %v587, %v593
        %v596 = vadd.f32 %v420, %v594
        %v597 = vlaneseq
        %vm598 = vcmp.ge.s32.totalorder %v597, 0
        %vm599 = vcmp.lt.s32.totalorder %v597, 512
        %vm600 = vmand %vm598, %vm599
        %601 = vst.msk [vmem:[#allocation2] sm:$0xf] %vm600, %v596
        %v602 = vld [vmem:[#allocation3] sm:$0x1]
        %v603 = vmul.f32 %v417, %v417
        %vm604 = vcmask 516096
        %v605 = vsel %vm604, %v603, 0.0
        %606 = vadd.xlane.f32.xlu0 %v605
        %v607 = vpop.xlane.xlu0 %606
        %v608 = vrot.slane %v607, 4
        %v609 = vadd.f32 %v607, %v608
        %v610 = vrot.slane %v609, 2
        %v611 = vadd.f32 %v609, %v610
        %v612 = vrot.slane %v611, 1
        %v613 = vadd.f32 %v611, %v612
        %s614 = vtos %v613
        %v615 = vstv %s614
        %v616 = vadd.f32 %v602, %v615
        %vm617 = vcmask 0
        %618 = vst.msk [vmem:[#allocation3] sm:$0x1] %vm617, %v616
        %p619 = scmp.eq.s32.totalorder %s22, 3
        // Predicated region
        $region41: #{spectral_normed_weight.2} parent=27 // pred_check
          %p620 = pneg %p619
        $region42: #{spectral_normed_weight.2} parent=27 // pred_check_branch
          %622 = sbr.rel (%p620) target = $region44
        $region43: #{spectral_normed_weight.2} parent=27 // pred_region
          %v623 = vld [vmem:[#allocation3] sm:$0x1]
          %v624 = vrsqrt.pop %v623
          %v625 = vmul.f32 %v623, %v624
          %vm626 = vcmp.eq.f32.partialorder %v623, inf
          %v627 = vsel %vm626, %v623, %v625
          %vm628 = vcmp.eq.f32.partialorder %v623, 0.0
          %v629 = vand.u32 %v623, 2147483648
          %v630 = vsel %vm628, %v629, %v627
          %v631 = vmax.f32 %v630, 1e-12
          %v632 = vld [vmem:[#allocation2] sm:$0xf]
          %634 = vset.pattern.permute.xlu0 0
          %635 = vperm.xlu0 %634, %v631
          %v636 = vpop.permute.xlu0 %635
          %v638 = vlaneseq
          %v639 = vshrl.u32 %v638, 7
          %v640 = vsub.s32 0, %v639
          %v641 = vrot.slane %v636, %v640
          %v642 = vrcp.pop %v641
          %v643 = vmul.f32 %v632, %v642
          %v644 = vmul.f32 %v643, %v643
          %v646 = vlaneseq
          %v647 = vshrl.u32 %v646, 7
          %v648 = vsub.s32 0, %v647
          %v649 = vrot.slane %v644, %v648
          %v650 = vlaneseq
          %v651 = vshrl.u32 %v650, 7
          %v652 = vsub.s32 1, %v651
          %v653 = vrot.slane %v644, %v652
          %v654 = vlaneseq
          %v655 = vshrl.u32 %v654, 7
          %v656 = vsub.s32 2, %v655
          %v657 = vrot.slane %v644, %v656
          %v658 = vlaneseq
          %v659 = vshrl.u32 %v658, 7
          %v660 = vsub.s32 3, %v659
          %v661 = vrot.slane %v644, %v660
          %vm666 = vcmask 1040384
          %v667 = vsel %vm666, %v649, 0.0
          %v668 = vsel %vm666, %v653, 0.0
          %v669 = vadd.f32 %v667, %v668
          %v670 = vsel %vm666, %v657, 0.0
          %v671 = vadd.f32 %v669, %v670
          %v672 = vsel %vm666, %v661, 0.0
          %v673 = vadd.f32 %v671, %v672
          %674 = vadd.xlane.f32.xlu0 %v673
          %v675 = vpop.xlane.xlu0 %674
          %v676 = vrot.slane %v675, 4
          %v677 = vadd.f32 %v675, %v676
          %v678 = vrot.slane %v677, 2
          %v679 = vadd.f32 %v677, %v678
          %v680 = vrot.slane %v679, 1
          %v681 = vadd.f32 %v679, %v680
          %s682 = vtos %v681
          %v683 = vstv %s682
          %v684 = vrsqrt.pop %v683
          %v685 = vmul.f32 %v683, %v684
          %vm686 = vcmp.eq.f32.partialorder %v683, inf
          %v687 = vsel %vm686, %v683, %v685
          %vm688 = vcmp.eq.f32.partialorder %v683, 0.0
          %v689 = vand.u32 %v683, 2147483648
          %v690 = vsel %vm688, %v689, %v687
          %v691 = vmax.f32 %v690, 1e-12
          %v692 = vrcp.pop %v691
          %v693 = vmul.f32 %v643, %v692
          %694 = vst.msk [vmem:[#allocation9] sm:$0xf] %vm600, %v693
          %v695 = vmul.f32 %v683, %v692
          %696 = vst.msk [vmem:[#allocation10] sm:$0x1] %vm617, %v695
          %v697 = vrcp.pop %v695
          %v698 = vmul.f32 1.0, %v697
          %699 = vst.msk [vmem:[#allocation12] sm:$0x1] %vm617, %v698
        $region44: #{spectral_normed_weight.2} parent=27 // pred_fallthru
          _
        // Predicated region
        $region45: #{spectral_normed_weight.2} parent=27 // pred_check
          %p700 = pneg %p82
        $region46: #{spectral_normed_weight.2} parent=27 // pred_check_branch
          %702 = sbr.rel (%p700) target = $region48
        $region47: #{spectral_normed_weight.2} parent=27 // pred_region
          %s704 = ssub.s32 64, 64
          %705 = vsyncadd [#allocation6], %s704
          %s707 = sshll.u32 [#allocation9], 4
          %s708 = int_to_ptr.vmem [resolvable:$true] %s707
          %710 = dma.vmem_to_hbm [thread:$0]  %s708, 64, %s2, [#allocation6]
        $region48: #{spectral_normed_weight.2} parent=27 // pred_fallthru
          _
        // Predicated region
        $region49: #{spectral_normed_weight.2} parent=27 // pred_check
          %p711 = pneg %p103
        $region50: #{spectral_normed_weight.2} parent=27 // pred_check_branch
          %713 = sbr.rel (%p711) target = $region52
        $region51: #{spectral_normed_weight.2} parent=27 // pred_region
          %s715 = ssub.s32 16, 16
          %716 = vsyncadd [#allocation11], %s715
          %s718 = sshll.u32 [#allocation10], 4
          %s719 = int_to_ptr.vmem [resolvable:$true] %s718
          %721 = dma.vmem_to_hbm [thread:$0]  %s719, 16, %s3, [#allocation11]
        $region52: #{spectral_normed_weight.2} parent=27 // pred_fallthru
          _
        // Predicated region
        $region53: #{spectral_normed_weight.2} parent=27 // pred_check
          %p722 = pneg %p124
        $region54: #{spectral_normed_weight.2} parent=27 // pred_check_branch
          %724 = sbr.rel (%p722) target = $region56
        $region55: #{spectral_normed_weight.2} parent=27 // pred_region
          %s726 = ssub.s32 16, 16
          %727 = vsyncadd [#allocation11], %s726
          %s729 = sshll.u32 [#allocation12], 4
          %s730 = int_to_ptr.vmem [resolvable:$true] %s729
          %732 = dma.vmem_to_hbm [thread:$0]  %s730, 16, %s4, [#allocation11]
        $region56: #{spectral_normed_weight.2} parent=27 // pred_fallthru
          _
        // Predicated region
        $region57: #{spectral_normed_weight.2} parent=27 // pred_check
          %p733 = pneg %p82
        $region58: #{spectral_normed_weight.2} parent=27 // pred_check_branch
          %735 = sbr.rel (%p733) target = $region60
        $region59: #{spectral_normed_weight.2} parent=27 // pred_region
          %736 = dma.done [#allocation6], 64
        $region60: #{spectral_normed_weight.2} parent=27 // pred_fallthru
          _
        // Predicated region
        $region61: #{spectral_normed_weight.2} parent=27 // pred_check
          %p737 = pneg %p103
        $region62: #{spectral_normed_weight.2} parent=27 // pred_check_branch
          %739 = sbr.rel (%p737) target = $region64
        $region63: #{spectral_normed_weight.2} parent=27 // pred_region
          %740 = dma.done [#allocation11], 16
        $region64: #{spectral_normed_weight.2} parent=27 // pred_fallthru
          _
        // Predicated region
        $region65: #{spectral_normed_weight.2} parent=27 // pred_check
          %p741 = pneg %p124
        $region66: #{spectral_normed_weight.2} parent=27 // pred_check_branch
          %743 = sbr.rel (%p741) target = $region68
        $region67: #{spectral_normed_weight.2} parent=27 // pred_region
          %744 = dma.done [#allocation11], 16
        $region68: #{spectral_normed_weight.2} parent=27 // pred_fallthru
          _
      $region28: #{spectral_normed_weight.2} parent=5 // pred_fallthru
        _
      %p745 = scmp.le.s32.totalorder 2, %s17
      // Predicated region
      $region69: #{spectral_normed_weight.2} parent=5 // pred_check
        %p746 = pneg %p745
      $region70: #{spectral_normed_weight.2} parent=5 // pred_check_branch
        %748 = sbr.rel (%p746) target = $region72
      $region71: #{spectral_normed_weight.2} parent=5 // pred_region
        %s749 = ssub.s32 %s17, 2
      $region72: #{spectral_normed_weight.2} parent=5 // pred_fallthru
        _
    $region6: #{spectral_normed_weight.2} parent=1 // loop_footer
      %s21 = sadd.s32 1, %s17
    $region7: #{spectral_normed_weight.2} parent=1 // loop_footer_branch
      %16 = sbr.rel target = $region3
    $region8: #{spectral_normed_weight.2} parent=1 // loop_exit
      _
    %750 = vsyncpa [#allocation5], 1
    %s751 = scalar_lea.sflag [#allocation5], 1
    %752 = vsyncpa %s751, 1
    %753 = vsyncpa [#allocation8], 1
    %754 = vsyncpa [#allocation6], 1
    %s755 = scalar_lea.sflag [#allocation6], 1
    %756 = vsyncpa %s755, 1
    %757 = vsyncpa [#allocation11], 1

// kernel: spectral_normed_weight.3
$region0: #{spectral_normed_weight.3}
  #allocation0 [shape = 'u32[]', space=smem, size = 0x4, offset = 0x4, fixed_abs, tag = 'smem constant byte address 0x4 - core index']
  #allocation1 [shape = 'u32[144,128]{1,0:T(1,128)}', space=vmem, size = 0x12000, scoped, tag = 'internal scratch']
  #allocation2 [shape = 'f32[1,1]{1,0:T(1,128)S(6)}', space=smem, size = 0x200, scoped, tag = 'scoped memory for spectral_normed_weight.3']
  %s0 = inlined_call_operand.<no memory space> [shape: f32[1,1], index: 0, kind: input, shape index: {}]
  %s1 = inlined_call_operand.vmem [shape: f32[256,512], index: 1, kind: input, shape index: {}]
  %s2 = inlined_call_operand.hbm [shape: f32[256,512], index: 2, kind: output, shape index: {}]
  %s3 = sld [smem:[#allocation0]]
  $region18: #{spectral_normed_weight.3} parent=0
    _
  %s5 = ssub.s32 1, %s3
  %s6 = scalar_select 0, %s5, %s3
  %7 = sst [smem:[#allocation2]] %s0
  $region1: #{spectral_normed_weight.3} parent=0
    #allocation3 [shape = 'u8[524288]{0}', space=vmem, size = 0x80000, scoped, tag = 'output window, operand 0, single buffered']
    #allocation4 [shape = 's32[1]{0}', space=sflag, size = 0x4, scoped, tag = 'scoped memory for spectral_normed_weight.3']
    %8 = vsyncpa [#allocation4], 0
    // Predicated region
    $region2: #{spectral_normed_weight.3} parent=1 // pred_check
      _
    $region3: #{spectral_normed_weight.3} parent=1 // pred_check_branch
      %10 = sbr.rel (0) target = $region5
    $region4: #{spectral_normed_weight.3} parent=1 // pred_region
      _
    $region5: #{spectral_normed_weight.3} parent=1 // pred_fallthru
      _
    // Predicated region
    $region6: #{spectral_normed_weight.3} parent=1 // pred_check
      _
    $region7: #{spectral_normed_weight.3} parent=1 // pred_check_branch
      %12 = sbr.rel (0) target = $region9
    $region8: #{spectral_normed_weight.3} parent=1 // pred_region
      _
    $region9: #{spectral_normed_weight.3} parent=1 // pred_fallthru
      _
    %v13 = vld [vmem:[%s1] sm:$0xff]
    %v14 = vld [vmem:[%s1 + $0x8] sm:$0xff]
    %v15 = vld [vmem:[%s1 + $0x10] sm:$0xff]
    %v16 = vld [vmem:[%s1 + $0x18] sm:$0xff]
    %v17 = vld [vmem:[%s1 + $0x20] sm:$0xff]
    %v18 = vld [vmem:[%s1 + $0x28] sm:$0xff]
    %v19 = vld [vmem:[%s1 + $0x30] sm:$0xff]
    %v20 = vld [vmem:[%s1 + $0x38] sm:$0xff]
    %v21 = vld [vmem:[%s1 + $0x40] sm:$0xff]
    %v22 = vld [vmem:[%s1 + $0x48] sm:$0xff]
    %v23 = vld [vmem:[%s1 + $0x50] sm:$0xff]
    %v24 = vld [vmem:[%s1 + $0x58] sm:$0xff]
    %v25 = vld [vmem:[%s1 + $0x60] sm:$0xff]
    %v26 = vld [vmem:[%s1 + $0x68] sm:$0xff]
    %v27 = vld [vmem:[%s1 + $0x70] sm:$0xff]
    %v28 = vld [vmem:[%s1 + $0x78] sm:$0xff]
    %v29 = vld [vmem:[%s1 + $0x80] sm:$0xff]
    %v30 = vld [vmem:[%s1 + $0x88] sm:$0xff]
    %v31 = vld [vmem:[%s1 + $0x90] sm:$0xff]
    %v32 = vld [vmem:[%s1 + $0x98] sm:$0xff]
    %v33 = vld [vmem:[%s1 + $0xa0] sm:$0xff]
    %v34 = vld [vmem:[%s1 + $0xa8] sm:$0xff]
    %v35 = vld [vmem:[%s1 + $0xb0] sm:$0xff]
    %v36 = vld [vmem:[%s1 + $0xb8] sm:$0xff]
    %v37 = vld [vmem:[%s1 + $0xc0] sm:$0xff]
    %v38 = vld [vmem:[%s1 + $0xc8] sm:$0xff]
    %v39 = vld [vmem:[%s1 + $0xd0] sm:$0xff]
    %v40 = vld [vmem:[%s1 + $0xd8] sm:$0xff]
    %v41 = vld [vmem:[%s1 + $0xe0] sm:$0xff]
    %v42 = vld [vmem:[%s1 + $0xe8] sm:$0xff]
    %v43 = vld [vmem:[%s1 + $0xf0] sm:$0xff]
    %v44 = vld [vmem:[%s1 + $0xf8] sm:$0xff]
    %v45 = vld [vmem:[%s1 + $0x100] sm:$0xff]
    %v46 = vld [vmem:[%s1 + $0x108] sm:$0xff]
    %v47 = vld [vmem:[%s1 + $0x110] sm:$0xff]
    %v48 = vld [vmem:[%s1 + $0x118] sm:$0xff]
    %v49 = vld [vmem:[%s1 + $0x120] sm:$0xff]
    %v50 = vld [vmem:[%s1 + $0x128] sm:$0xff]
    %v51 = vld [vmem:[%s1 + $0x130] sm:$0xff]
    %v52 = vld [vmem:[%s1 + $0x138] sm:$0xff]
    %v53 = vld [vmem:[%s1 + $0x140] sm:$0xff]
    %v54 = vld [vmem:[%s1 + $0x148] sm:$0xff]
    %v55 = vld [vmem:[%s1 + $0x150] sm:$0xff]
    %v56 = vld [vmem:[%s1 + $0x158] sm:$0xff]
    %v57 = vld [vmem:[%s1 + $0x160] sm:$0xff]
    %v58 = vld [vmem:[%s1 + $0x168] sm:$0xff]
    %v59 = vld [vmem:[%s1 + $0x170] sm:$0xff]
    %v60 = vld [vmem:[%s1 + $0x178] sm:$0xff]
    %v61 = vld [vmem:[%s1 + $0x180] sm:$0xff]
    %v62 = vld [vmem:[%s1 + $0x188] sm:$0xff]
    %v63 = vld [vmem:[%s1 + $0x190] sm:$0xff]
    %v64 = vld [vmem:[%s1 + $0x198] sm:$0xff]
    %v65 = vld [vmem:[%s1 + $0x1a0] sm:$0xff]
    %v66 = vld [vmem:[%s1 + $0x1a8] sm:$0xff]
    %v67 = vld [vmem:[%s1 + $0x1b0] sm:$0xff]
    %v68 = vld [vmem:[%s1 + $0x1b8] sm:$0xff]
    %v69 = vld [vmem:[%s1 + $0x1c0] sm:$0xff]
    %v70 = vld [vmem:[%s1 + $0x1c8] sm:$0xff]
    %v71 = vld [vmem:[%s1 + $0x1d0] sm:$0xff]
    %v72 = vld [vmem:[%s1 + $0x1d8] sm:$0xff]
    %v73 = vld [vmem:[%s1 + $0x1e0] sm:$0xff]
    %v74 = vld [vmem:[%s1 + $0x1e8] sm:$0xff]
    %v75 = vld [vmem:[%s1 + $0x1f0] sm:$0xff]
    %v76 = vld [vmem:[%s1 + $0x1f8] sm:$0xff]
    %v77 = vld [vmem:[%s1 + $0x200] sm:$0xff]
    %v78 = vld [vmem:[%s1 + $0x208] sm:$0xff]
    %v79 = vld [vmem:[%s1 + $0x210] sm:$0xff]
    %v80 = vld [vmem:[%s1 + $0x218] sm:$0xff]
    %v81 = vld [vmem:[%s1 + $0x220] sm:$0xff]
    %v82 = vld [vmem:[%s1 + $0x228] sm:$0xff]
    %v83 = vld [vmem:[%s1 + $0x230] sm:$0xff]
    %v84 = vld [vmem:[%s1 + $0x238] sm:$0xff]
    %v85 = vld [vmem:[%s1 + $0x240] sm:$0xff]
    %v86 = vld [vmem:[%s1 + $0x248] sm:$0xff]
    %v87 = vld [vmem:[%s1 + $0x250] sm:$0xff]
    %v88 = vld [vmem:[%s1 + $0x258] sm:$0xff]
    %v89 = vld [vmem:[%s1 + $0x260] sm:$0xff]
    %v90 = vld [vmem:[%s1 + $0x268] sm:$0xff]
    %v91 = vld [vmem:[%s1 + $0x270] sm:$0xff]
    %v92 = vld [vmem:[%s1 + $0x278] sm:$0xff]
    %v93 = vld [vmem:[%s1 + $0x280] sm:$0xff]
    %v94 = vld [vmem:[%s1 + $0x288] sm:$0xff]
    %v95 = vld [vmem:[%s1 + $0x290] sm:$0xff]
    %v96 = vld [vmem:[%s1 + $0x298] sm:$0xff]
    %v97 = vld [vmem:[%s1 + $0x2a0] sm:$0xff]
    %v98 = vld [vmem:[%s1 + $0x2a8] sm:$0xff]
    %v99 = vld [vmem:[%s1 + $0x2b0] sm:$0xff]
    %v100 = vld [vmem:[%s1 + $0x2b8] sm:$0xff]
    %v101 = vld [vmem:[%s1 + $0x2c0] sm:$0xff]
    %v102 = vld [vmem:[%s1 + $0x2c8] sm:$0xff]
    %v103 = vld [vmem:[%s1 + $0x2d0] sm:$0xff]
    %v104 = vld [vmem:[%s1 + $0x2d8] sm:$0xff]
    %v105 = vld [vmem:[%s1 + $0x2e0] sm:$0xff]
    %v106 = vld [vmem:[%s1 + $0x2e8] sm:$0xff]
    %v107 = vld [vmem:[%s1 + $0x2f0] sm:$0xff]
    %v108 = vld [vmem:[%s1 + $0x2f8] sm:$0xff]
    %v109 = vld [vmem:[%s1 + $0x300] sm:$0xff]
    %v110 = vld [vmem:[%s1 + $0x308] sm:$0xff]
    %v111 = vld [vmem:[%s1 + $0x310] sm:$0xff]
    %v112 = vld [vmem:[%s1 + $0x318] sm:$0xff]
    %v113 = vld [vmem:[%s1 + $0x320] sm:$0xff]
    %v114 = vld [vmem:[%s1 + $0x328] sm:$0xff]
    %v115 = vld [vmem:[%s1 + $0x330] sm:$0xff]
    %v116 = vld [vmem:[%s1 + $0x338] sm:$0xff]
    %v117 = vld [vmem:[%s1 + $0x340] sm:$0xff]
    %v118 = vld [vmem:[%s1 + $0x348] sm:$0xff]
    %v119 = vld [vmem:[%s1 + $0x350] sm:$0xff]
    %v120 = vld [vmem:[%s1 + $0x358] sm:$0xff]
    %v121 = vld [vmem:[%s1 + $0x360] sm:$0xff]
    %v122 = vld [vmem:[%s1 + $0x368] sm:$0xff]
    %v123 = vld [vmem:[%s1 + $0x370] sm:$0xff]
    %v124 = vld [vmem:[%s1 + $0x378] sm:$0xff]
    %v125 = vld [vmem:[%s1 + $0x380] sm:$0xff]
    %v126 = vld [vmem:[%s1 + $0x388] sm:$0xff]
    %v127 = vld [vmem:[%s1 + $0x390] sm:$0xff]
    %v128 = vld [vmem:[%s1 + $0x398] sm:$0xff]
    %v129 = vld [vmem:[%s1 + $0x3a0] sm:$0xff]
    %v130 = vld [vmem:[%s1 + $0x3a8] sm:$0xff]
    %v131 = vld [vmem:[%s1 + $0x3b0] sm:$0xff]
    %v132 = vld [vmem:[%s1 + $0x3b8] sm:$0xff]
    %v133 = vld [vmem:[%s1 + $0x3c0] sm:$0xff]
    %v134 = vld [vmem:[%s1 + $0x3c8] sm:$0xff]
    %v135 = vld [vmem:[%s1 + $0x3d0] sm:$0xff]
    %v136 = vld [vmem:[%s1 + $0x3d8] sm:$0xff]
    %v137 = vld [vmem:[%s1 + $0x3e0] sm:$0xff]
    %v138 = vld [vmem:[%s1 + $0x3e8] sm:$0xff]
    %v139 = vld [vmem:[%s1 + $0x3f0] sm:$0xff]
    %v140 = vld [vmem:[%s1 + $0x3f8] sm:$0xff]
    %s141 = sld [smem:[#allocation2]]
    %v142 = vstv %s141
    %v143 = vmul.f32 %v13, %v142
    %v144 = vmul.f32 %v14, %v142
    %v145 = vmul.f32 %v15, %v142
    %v146 = vmul.f32 %v16, %v142
    %v147 = vmul.f32 %v17, %v142
    %v148 = vmul.f32 %v18, %v142
    %v149 = vmul.f32 %v19, %v142
    %v150 = vmul.f32 %v20, %v142
    %v151 = vmul.f32 %v21, %v142
    %v152 = vmul.f32 %v22, %v142
    %v153 = vmul.f32 %v23, %v142
    %v154 = vmul.f32 %v24, %v142
    %v155 = vmul.f32 %v25, %v142
    %v156 = vmul.f32 %v26, %v142
    %v157 = vmul.f32 %v27, %v142
    %v158 = vmul.f32 %v28, %v142
    %v159 = vmul.f32 %v29, %v142
    %v160 = vmul.f32 %v30, %v142
    %v161 = vmul.f32 %v31, %v142
    %v162 = vmul.f32 %v32, %v142
    %v163 = vmul.f32 %v33, %v142
    %v164 = vmul.f32 %v34, %v142
    %v165 = vmul.f32 %v35, %v142
    %v166 = vmul.f32 %v36, %v142
    %v167 = vmul.f32 %v37, %v142
    %v168 = vmul.f32 %v38, %v142
    %v169 = vmul.f32 %v39, %v142
    %v170 = vmul.f32 %v40, %v142
    %v171 = vmul.f32 %v41, %v142
    %v172 = vmul.f32 %v42, %v142
    %v173 = vmul.f32 %v43, %v142
    %v174 = vmul.f32 %v44, %v142
    %v175 = vmul.f32 %v45, %v142
    %v176 = vmul.f32 %v46, %v142
    %v177 = vmul.f32 %v47, %v142
    %v178 = vmul.f32 %v48, %v142
    %v179 = vmul.f32 %v49, %v142
    %v180 = vmul.f32 %v50, %v142
    %v181 = vmul.f32 %v51, %v142
    %v182 = vmul.f32 %v52, %v142
    %v183 = vmul.f32 %v53, %v142
    %v184 = vmul.f32 %v54, %v142
    %v185 = vmul.f32 %v55, %v142
    %v186 = vmul.f32 %v56, %v142
    %v187 = vmul.f32 %v57, %v142
    %v188 = vmul.f32 %v58, %v142
    %v189 = vmul.f32 %v59, %v142
    %v190 = vmul.f32 %v60, %v142
    %v191 = vmul.f32 %v61, %v142
    %v192 = vmul.f32 %v62, %v142
    %v193 = vmul.f32 %v63, %v142
    %v194 = vmul.f32 %v64, %v142
    %v195 = vmul.f32 %v65, %v142
    %v196 = vmul.f32 %v66, %v142
    %v197 = vmul.f32 %v67, %v142
    %v198 = vmul.f32 %v68, %v142
    %v199 = vmul.f32 %v69, %v142
    %v200 = vmul.f32 %v70, %v142
    %v201 = vmul.f32 %v71, %v142
    %v202 = vmul.f32 %v72, %v142
    %v203 = vmul.f32 %v73, %v142
    %v204 = vmul.f32 %v74, %v142
    %v205 = vmul.f32 %v75, %v142
    %v206 = vmul.f32 %v76, %v142
    %v207 = vmul.f32 %v77, %v142
    %v208 = vmul.f32 %v78, %v142
    %v209 = vmul.f32 %v79, %v142
    %v210 = vmul.f32 %v80, %v142
    %v211 = vmul.f32 %v81, %v142
    %v212 = vmul.f32 %v82, %v142
    %v213 = vmul.f32 %v83, %v142
    %v214 = vmul.f32 %v84, %v142
    %v215 = vmul.f32 %v85, %v142
    %v216 = vmul.f32 %v86, %v142
    %v217 = vmul.f32 %v87, %v142
    %v218 = vmul.f32 %v88, %v142
    %v219 = vmul.f32 %v89, %v142
    %v220 = vmul.f32 %v90, %v142
    %v221 = vmul.f32 %v91, %v142
    %v222 = vmul.f32 %v92, %v142
    %v223 = vmul.f32 %v93, %v142
    %v224 = vmul.f32 %v94, %v142
    %v225 = vmul.f32 %v95, %v142
    %v226 = vmul.f32 %v96, %v142
    %v227 = vmul.f32 %v97, %v142
    %v228 = vmul.f32 %v98, %v142
    %v229 = vmul.f32 %v99, %v142
    %v230 = vmul.f32 %v100, %v142
    %v231 = vmul.f32 %v101, %v142
    %v232 = vmul.f32 %v102, %v142
    %v233 = vmul.f32 %v103, %v142
    %v234 = vmul.f32 %v104, %v142
    %v235 = vmul.f32 %v105, %v142
    %v236 = vmul.f32 %v106, %v142
    %v237 = vmul.f32 %v107, %v142
    %v238 = vmul.f32 %v108, %v142
    %v239 = vmul.f32 %v109, %v142
    %v240 = vmul.f32 %v110, %v142
    %v241 = vmul.f32 %v111, %v142
    %v242 = vmul.f32 %v112, %v142
    %v243 = vmul.f32 %v113, %v142
    %v244 = vmul.f32 %v114, %v142
    %v245 = vmul.f32 %v115, %v142
    %v246 = vmul.f32 %v116, %v142
    %v247 = vmul.f32 %v117, %v142
    %v248 = vmul.f32 %v118, %v142
    %v249 = vmul.f32 %v119, %v142
    %v250 = vmul.f32 %v120, %v142
    %v251 = vmul.f32 %v121, %v142
    %v252 = vmul.f32 %v122, %v142
    %v253 = vmul.f32 %v123, %v142
    %v254 = vmul.f32 %v124, %v142
    %v255 = vmul.f32 %v125, %v142
    %v256 = vmul.f32 %v126, %v142
    %v257 = vmul.f32 %v127, %v142
    %v258 = vmul.f32 %v128, %v142
    %v259 = vmul.f32 %v129, %v142
    %v260 = vmul.f32 %v130, %v142
    %v261 = vmul.f32 %v131, %v142
    %v262 = vmul.f32 %v132, %v142
    %v263 = vmul.f32 %v133, %v142
    %v264 = vmul.f32 %v134, %v142
    %v265 = vmul.f32 %v135, %v142
    %v266 = vmul.f32 %v136, %v142
    %v267 = vmul.f32 %v137, %v142
    %v268 = vmul.f32 %v138, %v142
    %v269 = vmul.f32 %v139, %v142
    %v270 = vmul.f32 %v140, %v142
    %271 = vst [vmem:[#allocation3] sm:$0xff] %v143
    %272 = vst [vmem:[#allocation3 + $0x8] sm:$0xff] %v144
    %273 = vst [vmem:[#allocation3 + $0x10] sm:$0xff] %v145
    %274 = vst [vmem:[#allocation3 + $0x18] sm:$0xff] %v146
    %275 = vst [vmem:[#allocation3 + $0x20] sm:$0xff] %v147
    %276 = vst [vmem:[#allocation3 + $0x28] sm:$0xff] %v148
    %277 = vst [vmem:[#allocation3 + $0x30] sm:$0xff] %v149
    %278 = vst [vmem:[#allocation3 + $0x38] sm:$0xff] %v150
    %279 = vst [vmem:[#allocation3 + $0x40] sm:$0xff] %v151
    %280 = vst [vmem:[#allocation3 + $0x48] sm:$0xff] %v152
    %281 = vst [vmem:[#allocation3 + $0x50] sm:$0xff] %v153
    %282 = vst [vmem:[#allocation3 + $0x58] sm:$0xff] %v154
    %283 = vst [vmem:[#allocation3 + $0x60] sm:$0xff] %v155
    %284 = vst [vmem:[#allocation3 + $0x68] sm:$0xff] %v156
    %285 = vst [vmem:[#allocation3 + $0x70] sm:$0xff] %v157
    %286 = vst [vmem:[#allocation3 + $0x78] sm:$0xff] %v158
    %287 = vst [vmem:[#allocation3 + $0x80] sm:$0xff] %v159
    %288 = vst [vmem:[#allocation3 + $0x88] sm:$0xff] %v160
    %289 = vst [vmem:[#allocation3 + $0x90] sm:$0xff] %v161
    %290 = vst [vmem:[#allocation3 + $0x98] sm:$0xff] %v162
    %291 = vst [vmem:[#allocation3 + $0xa0] sm:$0xff] %v163
    %292 = vst [vmem:[#allocation3 + $0xa8] sm:$0xff] %v164
    %293 = vst [vmem:[#allocation3 + $0xb0] sm:$0xff] %v165
    %294 = vst [vmem:[#allocation3 + $0xb8] sm:$0xff] %v166
    %295 = vst [vmem:[#allocation3 + $0xc0] sm:$0xff] %v167
    %296 = vst [vmem:[#allocation3 + $0xc8] sm:$0xff] %v168
    %297 = vst [vmem:[#allocation3 + $0xd0] sm:$0xff] %v169
    %298 = vst [vmem:[#allocation3 + $0xd8] sm:$0xff] %v170
    %299 = vst [vmem:[#allocation3 + $0xe0] sm:$0xff] %v171
    %300 = vst [vmem:[#allocation3 + $0xe8] sm:$0xff] %v172
    %301 = vst [vmem:[#allocation3 + $0xf0] sm:$0xff] %v173
    %302 = vst [vmem:[#allocation3 + $0xf8] sm:$0xff] %v174
    %303 = vst [vmem:[#allocation3 + $0x100] sm:$0xff] %v175
    %304 = vst [vmem:[#allocation3 + $0x108] sm:$0xff] %v176
    %305 = vst [vmem:[#allocation3 + $0x110] sm:$0xff] %v177
    %306 = vst [vmem:[#allocation3 + $0x118] sm:$0xff] %v178
    %307 = vst [vmem:[#allocation3 + $0x120] sm:$0xff] %v179
    %308 = vst [vmem:[#allocation3 + $0x128] sm:$0xff] %v180
    %309 = vst [vmem:[#allocation3 + $0x130] sm:$0xff] %v181
    %310 = vst [vmem:[#allocation3 + $0x138] sm:$0xff] %v182
    %311 = vst [vmem:[#allocation3 + $0x140] sm:$0xff] %v183
    %312 = vst [vmem:[#allocation3 + $0x148] sm:$0xff] %v184
    %313 = vst [vmem:[#allocation3 + $0x150] sm:$0xff] %v185
    %314 = vst [vmem:[#allocation3 + $0x158] sm:$0xff] %v186
    %315 = vst [vmem:[#allocation3 + $0x160] sm:$0xff] %v187
    %316 = vst [vmem:[#allocation3 + $0x168] sm:$0xff] %v188
    %317 = vst [vmem:[#allocation3 + $0x170] sm:$0xff] %v189
    %318 = vst [vmem:[#allocation3 + $0x178] sm:$0xff] %v190
    %319 = vst [vmem:[#allocation3 + $0x180] sm:$0xff] %v191
    %320 = vst [vmem:[#allocation3 + $0x188] sm:$0xff] %v192
    %321 = vst [vmem:[#allocation3 + $0x190] sm:$0xff] %v193
    %322 = vst [vmem:[#allocation3 + $0x198] sm:$0xff] %v194
    %323 = vst [vmem:[#allocation3 + $0x1a0] sm:$0xff] %v195
    %324 = vst [vmem:[#allocation3 + $0x1a8] sm:$0xff] %v196
    %325 = vst [vmem:[#allocation3 + $0x1b0] sm:$0xff] %v197
    %326 = vst [vmem:[#allocation3 + $0x1b8] sm:$0xff] %v198
    %327 = vst [vmem:[#allocation3 + $0x1c0] sm:$0xff] %v199
    %328 = vst [vmem:[#allocation3 + $0x1c8] sm:$0xff] %v200
    %329 = vst [vmem:[#allocation3 + $0x1d0] sm:$0xff] %v201
    %330 = vst [vmem:[#allocation3 + $0x1d8] sm:$0xff] %v202
    %331 = vst [vmem:[#allocation3 + $0x1e0] sm:$0xff] %v203
    %332 = vst [vmem:[#allocation3 + $0x1e8] sm:$0xff] %v204
    %333 = vst [vmem:[#allocation3 + $0x1f0] sm:$0xff] %v205
    %334 = vst [vmem:[#allocation3 + $0x1f8] sm:$0xff] %v206
    %335 = vst [vmem:[#allocation3 + $0x200] sm:$0xff] %v207
    %336 = vst [vmem:[#allocation3 + $0x208] sm:$0xff] %v208
    %337 = vst [vmem:[#allocation3 + $0x210] sm:$0xff] %v209
    %338 = vst [vmem:[#allocation3 + $0x218] sm:$0xff] %v210
    %339 = vst [vmem:[#allocation3 + $0x220] sm:$0xff] %v211
    %340 = vst [vmem:[#allocation3 + $0x228] sm:$0xff] %v212
    %341 = vst [vmem:[#allocation3 + $0x230] sm:$0xff] %v213
    %342 = vst [vmem:[#allocation3 + $0x238] sm:$0xff] %v214
    %343 = vst [vmem:[#allocation3 + $0x240] sm:$0xff] %v215
    %344 = vst [vmem:[#allocation3 + $0x248] sm:$0xff] %v216
    %345 = vst [vmem:[#allocation3 + $0x250] sm:$0xff] %v217
    %346 = vst [vmem:[#allocation3 + $0x258] sm:$0xff] %v218
    %347 = vst [vmem:[#allocation3 + $0x260] sm:$0xff] %v219
    %348 = vst [vmem:[#allocation3 + $0x268] sm:$0xff] %v220
    %349 = vst [vmem:[#allocation3 + $0x270] sm:$0xff] %v221
    %350 = vst [vmem:[#allocation3 + $0x278] sm:$0xff] %v222
    %351 = vst [vmem:[#allocation3 + $0x280] sm:$0xff] %v223
    %352 = vst [vmem:[#allocation3 + $0x288] sm:$0xff] %v224
    %353 = vst [vmem:[#allocation3 + $0x290] sm:$0xff] %v225
    %354 = vst [vmem:[#allocation3 + $0x298] sm:$0xff] %v226
    %355 = vst [vmem:[#allocation3 + $0x2a0] sm:$0xff] %v227
    %356 = vst [vmem:[#allocation3 + $0x2a8] sm:$0xff] %v228
    %357 = vst [vmem:[#allocation3 + $0x2b0] sm:$0xff] %v229
    %358 = vst [vmem:[#allocation3 + $0x2b8] sm:$0xff] %v230
    %359 = vst [vmem:[#allocation3 + $0x2c0] sm:$0xff] %v231
    %360 = vst [vmem:[#allocation3 + $0x2c8] sm:$0xff] %v232
    %361 = vst [vmem:[#allocation3 + $0x2d0] sm:$0xff] %v233
    %362 = vst [vmem:[#allocation3 + $0x2d8] sm:$0xff] %v234
    %363 = vst [vmem:[#allocation3 + $0x2e0] sm:$0xff] %v235
    %364 = vst [vmem:[#allocation3 + $0x2e8] sm:$0xff] %v236
    %365 = vst [vmem:[#allocation3 + $0x2f0] sm:$0xff] %v237
    %366 = vst [vmem:[#allocation3 + $0x2f8] sm:$0xff] %v238
    %367 = vst [vmem:[#allocation3 + $0x300] sm:$0xff] %v239
    %368 = vst [vmem:[#allocation3 + $0x308] sm:$0xff] %v240
    %369 = vst [vmem:[#allocation3 + $0x310] sm:$0xff] %v241
    %370 = vst [vmem:[#allocation3 + $0x318] sm:$0xff] %v242
    %371 = vst [vmem:[#allocation3 + $0x320] sm:$0xff] %v243
    %372 = vst [vmem:[#allocation3 + $0x328] sm:$0xff] %v244
    %373 = vst [vmem:[#allocation3 + $0x330] sm:$0xff] %v245
    %374 = vst [vmem:[#allocation3 + $0x338] sm:$0xff] %v246
    %375 = vst [vmem:[#allocation3 + $0x340] sm:$0xff] %v247
    %376 = vst [vmem:[#allocation3 + $0x348] sm:$0xff] %v248
    %377 = vst [vmem:[#allocation3 + $0x350] sm:$0xff] %v249
    %378 = vst [vmem:[#allocation3 + $0x358] sm:$0xff] %v250
    %379 = vst [vmem:[#allocation3 + $0x360] sm:$0xff] %v251
    %380 = vst [vmem:[#allocation3 + $0x368] sm:$0xff] %v252
    %381 = vst [vmem:[#allocation3 + $0x370] sm:$0xff] %v253
    %382 = vst [vmem:[#allocation3 + $0x378] sm:$0xff] %v254
    %383 = vst [vmem:[#allocation3 + $0x380] sm:$0xff] %v255
    %384 = vst [vmem:[#allocation3 + $0x388] sm:$0xff] %v256
    %385 = vst [vmem:[#allocation3 + $0x390] sm:$0xff] %v257
    %386 = vst [vmem:[#allocation3 + $0x398] sm:$0xff] %v258
    %387 = vst [vmem:[#allocation3 + $0x3a0] sm:$0xff] %v259
    %388 = vst [vmem:[#allocation3 + $0x3a8] sm:$0xff] %v260
    %389 = vst [vmem:[#allocation3 + $0x3b0] sm:$0xff] %v261
    %390 = vst [vmem:[#allocation3 + $0x3b8] sm:$0xff] %v262
    %391 = vst [vmem:[#allocation3 + $0x3c0] sm:$0xff] %v263
    %392 = vst [vmem:[#allocation3 + $0x3c8] sm:$0xff] %v264
    %393 = vst [vmem:[#allocation3 + $0x3d0] sm:$0xff] %v265
    %394 = vst [vmem:[#allocation3 + $0x3d8] sm:$0xff] %v266
    %395 = vst [vmem:[#allocation3 + $0x3e0] sm:$0xff] %v267
    %396 = vst [vmem:[#allocation3 + $0x3e8] sm:$0xff] %v268
    %397 = vst [vmem:[#allocation3 + $0x3f0] sm:$0xff] %v269
    %398 = vst [vmem:[#allocation3 + $0x3f8] sm:$0xff] %v270
    // Predicated region
    $region10: #{spectral_normed_weight.3} parent=1 // pred_check
      _
    $region11: #{spectral_normed_weight.3} parent=1 // pred_check_branch
      %400 = sbr.rel (0) target = $region13
    $region12: #{spectral_normed_weight.3} parent=1 // pred_region
      %s402 = ssub.s32 16384, 16384
      %403 = vsyncadd [#allocation4], %s402
      %s404 = sshll.u32 [#allocation3], 4
      %s405 = int_to_ptr.vmem [resolvable:$true] %s404
      %410 = dma.vmem_to_hbm [thread:$0]  %s405, 16384, %s2, [#allocation4], 512, 512, 32
    $region13: #{spectral_normed_weight.3} parent=1 // pred_fallthru
      _
    // Predicated region
    $region14: #{spectral_normed_weight.3} parent=1 // pred_check
      _
    $region15: #{spectral_normed_weight.3} parent=1 // pred_check_branch
      %412 = sbr.rel (0) target = $region17
    $region16: #{spectral_normed_weight.3} parent=1 // pred_region
      %413 = dma.done [#allocation4], 16384
    $region17: #{spectral_normed_weight.3} parent=1 // pred_fallthru
      _
    %414 = vsyncpa [#allocation4], 1

</llo_original>
